<compile_context>
chip_gen: v7x
topology: tpu7x:2x2x1
jax: 0.10.0
libtpu: 0.0.40
codegen_flags: <defaults>
</compile_context>

<pallas_src>
import functools

import jax
import jax.numpy as jnp
from jax.experimental import pallas as pl
from jax.experimental.pallas import tpu as pltpu


MATMUL_DTYPE = jnp.bfloat16   # MXU operand dtype; accumulation stays f32.


# ----------------------------- in-kernel helpers -----------------------------

def _layernorm_f32(x, gamma, beta, eps):
    mean = jnp.mean(x, axis=-1, keepdims=True)
    var = jnp.mean(jnp.square(x - mean), axis=-1, keepdims=True)
    y = (x - mean) * jax.lax.rsqrt(var + eps)
    return y * gamma + beta


# ----------------------------- Pallas kernels -----------------------------

def _embed_kernel(patch_ref, w_ref, cls_ref, pos_ref, g_ref, b_ref, o_ref, *, eps):
    """Patch-conv matmul + CLS token + position embedding + pre-LayerNorm (one batch elem)."""
    f32 = jnp.float32
    g = g_ref[...].astype(f32)
    b = b_ref[...].astype(f32)
    pos = pos_ref[...].astype(f32)                                   # (S, D)

    # stride-P conv == (n_patch, C*P*P) @ (C*P*P, D) on the MXU (bf16 operands, f32 acc).
    pe = jnp.dot(patch_ref[0].astype(w_ref.dtype), w_ref[...],
                 preferred_element_type=f32)                          # (n_patch, D)
    pe = pe + pos[1:, :]
    o_ref[0, 1:, :] = _layernorm_f32(pe, g, b, eps).astype(o_ref.dtype)

    cls = cls_ref[...].astype(f32) + pos[0:1, :]                      # (1, D)
    o_ref[0, 0:1, :] = _layernorm_f32(cls, g, b, eps).astype(o_ref.dtype)


def _attn_block_kernel(h_ref, g1_ref, b1_ref, wqkv_ref, bqkv_ref, wo_ref, bo_ref,
                       o_ref, *, num_heads, head_dim, eps, scale):
    """LN1 + fused QKV + multi-head attention + out-proj + residual (one batch elem)."""
    f32 = jnp.float32
    mm = wqkv_ref.dtype
    x = h_ref[0].astype(f32)                                          # (S, D) residual in
    D = num_heads * head_dim

    ln = _layernorm_f32(x, g1_ref[...].astype(f32), b1_ref[...].astype(f32), eps)

    # fused QKV projection: one MXU pass with N = 3D (lane-dense), f32 accumulation.
    qkv = jnp.dot(ln.astype(mm), wqkv_ref[...], preferred_element_type=f32)
    qkv = qkv + bqkv_ref[...].astype(f32)                             # (S, 3D)

    wo = wo_ref[...]                                                  # (D, D) bf16
    out = None
    # All heads of this batch element handled in this grid step; heads are static lane
    # slices of the fused QKV activation (no HBM transposes, no materialized k.T).
    for h in range(num_heads):
        lo = h * head_dim
        qh = qkv[:, lo:lo + head_dim].astype(mm)                      # (S, Dh)
        kh = qkv[:, D + lo:D + lo + head_dim].astype(mm)              # (S, Dh)
        vh = qkv[:, 2 * D + lo:2 * D + lo + head_dim].astype(mm)      # (S, Dh)

        s = jax.lax.dot_general(qh, kh, (((1,), (1,)), ((), ())),
                                preferred_element_type=f32)           # (S, S)
        s = s * scale
        s = s - jnp.max(s, axis=-1, keepdims=True)
        p = jnp.exp(s)
        p = p * pl.reciprocal(jnp.sum(p, axis=-1, keepdims=True), approx=True)

        ctx_h = jnp.dot(p.astype(mm), vh, preferred_element_type=f32)  # (S, Dh)
        # out-projection folded in per head: ctx_h @ wo[h*Dh:(h+1)*Dh, :], accumulated
        # into a lane-dense (S, D) f32 buffer (avoids a lane concat + narrow stores).
        contrib = jnp.dot(ctx_h.astype(mm), wo[lo:lo + head_dim, :],
                          preferred_element_type=f32)                 # (S, D)
        out = contrib if out is None else out + contrib

    out = out + bo_ref[...].astype(f32)
    o_ref[0] = (x + out).astype(o_ref.dtype)                          # residual folded in


def _mlp_block_kernel(h_ref, g2_ref, b2_ref, w1_ref, fb1_ref, w2_ref, fb2_ref,
                      o_ref, *, eps):
    """LN2 + fc1 + quick_gelu + fc2 + residual (one batch elem)."""
    f32 = jnp.float32
    mm = w1_ref.dtype
    x = h_ref[0].astype(f32)                                          # (S, D)

    ln = _layernorm_f32(x, g2_ref[...].astype(f32), b2_ref[...].astype(f32), eps)

    h1 = jnp.dot(ln.astype(mm), w1_ref[...], preferred_element_type=f32)
    h1 = h1 + fb1_ref[...].astype(f32)
    h1 = h1 * jax.nn.sigmoid(1.702 * h1)                              # quick_gelu (f32, EUP)

    h2 = jnp.dot(h1.astype(mm), w2_ref[...], preferred_element_type=f32)
    h2 = h2 + fb2_ref[...].astype(f32)

    o_ref[0] = (x + h2).astype(o_ref.dtype)                           # residual folded in


# ----------------------------- pallas_call wrappers -----------------------------

def _full_spec(shape):
    n = len(shape)
    return pl.BlockSpec(shape, lambda b: (0,) * n)


def _batch_spec(S, D):
    return pl.BlockSpec((1, S, D), lambda b: (b, 0, 0))


_PARALLEL_B = pltpu.CompilerParams(dimension_semantics=("parallel",))


def clip_embed(patches, w_flat, cls_emb, pos_emb, ln_g, ln_b, *, eps):
    B, n_patch, K = patches.shape
    D = w_flat.shape[1]
    S = n_patch + 1
    return pl.pallas_call(
        functools.partial(_embed_kernel, eps=eps),
        out_shape=jax.ShapeDtypeStruct((B, S, D), jnp.float32),
        grid=(B,),
        in_specs=[
            pl.BlockSpec((1, n_patch, K), lambda b: (b, 0, 0)),
            _full_spec((K, D)),
            _full_spec((1, D)),
            _full_spec((S, D)),
            _full_spec((1, D)),
            _full_spec((1, D)),
        ],
        out_specs=_batch_spec(S, D),
        compiler_params=_PARALLEL_B,
    )(patches, w_flat, cls_emb.reshape(1, D), pos_emb,
      ln_g.reshape(1, D), ln_b.reshape(1, D))


def clip_attn_block(hidden, layer, *, num_heads, eps):
    B, S, D = hidden.shape
    head_dim = D // num_heads
    scale = head_dim ** -0.5
    kernel = functools.partial(_attn_block_kernel, num_heads=num_heads,
                               head_dim=head_dim, eps=eps, scale=scale)
    return pl.pallas_call(
        kernel,
        out_shape=jax.ShapeDtypeStruct((B, S, D), hidden.dtype),
        grid=(B,),
        in_specs=[
            _batch_spec(S, D),
            _full_spec((1, D)), _full_spec((1, D)),
            _full_spec((D, 3 * D)), _full_spec((1, 3 * D)),
            _full_spec((D, D)), _full_spec((1, D)),
        ],
        out_specs=_batch_spec(S, D),
        compiler_params=_PARALLEL_B,
    )(hidden,
      layer["ln1_g"].reshape(1, D), layer["ln1_b"].reshape(1, D),
      layer["qkv_w"], layer["qkv_b"].reshape(1, 3 * D),
      layer["o_w"], layer["o_b"].reshape(1, D))


def clip_mlp_block(hidden, layer, *, eps):
    B, S, D = hidden.shape
    I = layer["fc1_w"].shape[1]
    return pl.pallas_call(
        functools.partial(_mlp_block_kernel, eps=eps),
        out_shape=jax.ShapeDtypeStruct((B, S, D), hidden.dtype),
        grid=(B,),
        in_specs=[
            _batch_spec(S, D),
            _full_spec((1, D)), _full_spec((1, D)),
            _full_spec((D, I)), _full_spec((1, I)),
            _full_spec((I, D)), _full_spec((1, D)),
        ],
        out_specs=_batch_spec(S, D),
        compiler_params=_PARALLEL_B,
    )(hidden,
      layer["ln2_g"].reshape(1, D), layer["ln2_b"].reshape(1, D),
      layer["fc1_w"], layer["fc1_b"].reshape(1, I),
      layer["fc2_w"], layer["fc2_b"].reshape(1, D))


# ----------------------------- CLIP vision tower (synthetic config) -----------------------------

class Config:
    image_size = 16
    patch_size = 8
    num_channels = 3
    hidden_size = 64
    num_attention_heads = 4
    intermediate_size = 128
    num_hidden_layers = 3
    layer_norm_eps = 1e-5


def init_params(key, cfg):
    """Deterministic synthetic weights (no checkpoint load).

    Weights are stored in kernel-friendly layouts:
      * patch_w : (C*P*P, D)  -- PyTorch Conv2d (D, C, P, P) flattened/transposed.
      * qkv_w   : (D, 3D)     -- q/k/v projections concatenated (single MXU pass).
      * matmul weights in bf16 (MXU dtype); LN params / biases / embeddings in f32.
    """
    P, C, D, I = cfg.patch_size, cfg.num_channels, cfg.hidden_size, cfg.intermediate_size
    K = C * P * P
    num_pos = (cfg.image_size // cfg.patch_size) ** 2 + 1
    keys = iter(jax.random.split(key, 3 + 4 * cfg.num_hidden_layers))
    std = 0.02

    def w(shape, dtype=MATMUL_DTYPE):
        return (jax.random.normal(next(keys), shape, jnp.float32) * std).astype(dtype)

    params = {
        "patch_w": w((K, D)),
        "class_embedding": w((D,), jnp.float32),
        "position_embedding": w((num_pos, D), jnp.float32),
        "pre_ln_g": jnp.ones((D,), jnp.float32),
        "pre_ln_b": jnp.zeros((D,), jnp.float32),
        "layers": [],
    }
    for _ in range(cfg.num_hidden_layers):
        params["layers"].append({
            "ln1_g": jnp.ones((D,), jnp.float32), "ln1_b": jnp.zeros((D,), jnp.float32),
            "qkv_w": w((D, 3 * D)), "qkv_b": jnp.zeros((3 * D,), jnp.float32),
            "o_w": w((D, D)), "o_b": jnp.zeros((D,), jnp.float32),
            "ln2_g": jnp.ones((D,), jnp.float32), "ln2_b": jnp.zeros((D,), jnp.float32),
            "fc1_w": w((D, I)), "fc1_b": jnp.zeros((I,), jnp.float32),
            "fc2_w": w((I, D)), "fc2_b": jnp.zeros((D,), jnp.float32),
        })
    return params


def clip_vision_tower_forward(images, params, cfg,
                              select_layer=-2, select_feature="patch"):
    """images: NCHW float32 (B, C, H, W) -> selected hidden state features."""
    B, C, H, W = images.shape
    P = cfg.patch_size
    gh, gw = H // P, W // P
    n_patch = gh * gw

    # im2col for the stride-P patch conv (one-time XLA layout op); the matmul itself
    # runs inside the fused embedding kernel.
    x = images.reshape(B, C, gh, P, gw, P).transpose(0, 2, 4, 1, 3, 5)
    patches = x.reshape(B, n_patch, C * P * P)

    # Embedding stage: patch matmul + CLS + position embedding + pre-LayerNorm.
    # (This is hidden_states[0] in HF CLIP.)
    hidden = clip_embed(patches, params["patch_w"], params["class_embedding"],
                        params["position_embedding"], params["pre_ln_g"],
                        params["pre_ln_b"], eps=cfg.layer_norm_eps)

    # hidden_states has num_hidden_layers + 1 entries; only run the layers actually
    # needed to produce hidden_states[select_layer] (identical output semantics).
    num_states = cfg.num_hidden_layers + 1
    idx = select_layer if select_layer >= 0 else num_states + select_layer
    if not 0 <= idx < num_states:
        raise ValueError(f"select_layer {select_layer} out of range")

    for layer in params["layers"][:idx]:
        hidden = clip_attn_block(hidden, layer,
                                 num_heads=cfg.num_attention_heads,
                                 eps=cfg.layer_norm_eps)
        hidden = clip_mlp_block(hidden, layer, eps=cfg.layer_norm_eps)

    # feature_select (matches CLIPVisionTower.feature_select)
    feats = hidden
    if select_feature == "patch":
        feats = feats[:, 1:]                                    # drop CLS token
    elif select_feature == "cls_patch":
        pass
    else:
        raise ValueError(f"Unexpected select feature: {select_feature}")
    return feats.astype(images.dtype)


if __name__ == "__main__":
    cfg = Config()
    key = jax.random.PRNGKey(0)
    k_param, k_img = jax.random.split(key)
    params = init_params(k_param, cfg)

    B = 2
    images = jax.random.normal(
        k_img, (B, cfg.num_channels, cfg.image_size, cfg.image_size), jnp.float32)

    fwd = jax.jit(lambda imgs, prm: clip_vision_tower_forward(
        imgs, prm, cfg, select_layer=-2, select_feature="patch"))
    feats = jax.block_until_ready(fwd(images, params))

    n_patch = (cfg.image_size // cfg.patch_size) ** 2
    assert feats.shape == (B, n_patch, cfg.hidden_size), feats.shape
    assert feats.dtype == images.dtype
    assert bool(jnp.all(jnp.isfinite(feats)))
    print("KERNEL_OK")
</pallas_src>

<mosaic_0001>
module attributes {stable_mosaic.version = 11 : i64} {
  func.func @_embed_kernel(%arg0: i32, %arg1: memref<1x4x192xf32, #tpu.memory_space<vmem>>, %arg2: memref<192x64xbf16, #tpu.memory_space<vmem>>, %arg3: memref<1x64xf32, #tpu.memory_space<vmem>>, %arg4: memref<5x64xf32, #tpu.memory_space<vmem>>, %arg5: memref<1x64xf32, #tpu.memory_space<vmem>>, %arg6: memref<1x64xf32, #tpu.memory_space<vmem>>, %arg7: memref<1x5x64xf32, #tpu.memory_space<vmem>>) attributes {dimension_semantics = [#tpu.dimension_semantics<parallel>], iteration_bounds = array<i64: 2>, scalar_prefetch = 0 : i64, scratch_operands = 0 : i64, tpu.core_type = #tpu.core_type<tc>, window_params = [{transform_indices = @transform_0, window_bounds = array<i64: 1, 4, 192>}, {pipeline_mode = #tpu.pipeline_mode<synchronous>, transform_indices = @transform_1, window_bounds = array<i64: 192, 64>}, {pipeline_mode = #tpu.pipeline_mode<synchronous>, transform_indices = @transform_2, window_bounds = array<i64: 1, 64>}, {pipeline_mode = #tpu.pipeline_mode<synchronous>, transform_indices = @transform_3, window_bounds = array<i64: 5, 64>}, {pipeline_mode = #tpu.pipeline_mode<synchronous>, transform_indices = @transform_4, window_bounds = array<i64: 1, 64>}, {pipeline_mode = #tpu.pipeline_mode<synchronous>, transform_indices = @transform_5, window_bounds = array<i64: 1, 64>}, {transform_indices = @transform_6, window_bounds = array<i64: 1, 5, 64>}]} {
    %c0 = arith.constant 0 : index
    %c0_0 = arith.constant 0 : index
    %0 = vector.load %arg5[%c0, %c0_0] : memref<1x64xf32, #tpu.memory_space<vmem>>, vector<1x64xf32>
    %c0_1 = arith.constant 0 : index
    %c0_2 = arith.constant 0 : index
    %1 = vector.load %arg6[%c0_1, %c0_2] : memref<1x64xf32, #tpu.memory_space<vmem>>, vector<1x64xf32>
    %c0_3 = arith.constant 0 : index
    %c0_4 = arith.constant 0 : index
    %2 = vector.load %arg4[%c0_3, %c0_4] : memref<5x64xf32, #tpu.memory_space<vmem>>, vector<5x64xf32>
    %c0_5 = arith.constant 0 : index
    %c0_6 = arith.constant 0 : index
    %c0_7 = arith.constant 0 : index
    %3 = vector.load %arg1[%c0_5, %c0_6, %c0_7] : memref<1x4x192xf32, #tpu.memory_space<vmem>>, vector<1x4x192xf32>
    %4 = vector.shape_cast %3 : vector<1x4x192xf32> to vector<4x192xf32>
    %5 = arith.truncf %4 : vector<4x192xf32> to vector<4x192xbf16>
    %c0_8 = arith.constant 0 : index
    %c0_9 = arith.constant 0 : index
    %6 = vector.load %arg2[%c0_8, %c0_9] : memref<192x64xbf16, #tpu.memory_space<vmem>>, vector<192x64xbf16>
    %cst = arith.constant dense<0.000000e+00> : vector<4x64xf32>
    %7 = tpu.matmul %5, %6, %cst {dimension_numbers = #tpu.dot_dimension_numbers<[1], [0], [0], [1], [0, 0, 1, 1], [], []>} : vector<4x192xbf16>, vector<192x64xbf16>, vector<4x64xf32> -> vector<4x64xf32>
    %8 = vector.extract_strided_slice %2 {offsets = [1, 0], sizes = [4, 64], strides = [1, 1]} : vector<5x64xf32> to vector<4x64xf32>
    %9 = arith.addf %7, %8 : vector<4x64xf32>
    %cst_10 = arith.constant dense<0.000000e+00> : vector<4xf32>
    %10 = vector.multi_reduction <add>, %9, %cst_10 [1] : vector<4x64xf32> to vector<4xf32>
    %11 = vector.shape_cast %10 : vector<4xf32> to vector<4x1xf32>
    %cst_11 = arith.constant 6.400000e+01 : f32
    %12 = vector.broadcast %cst_11 : f32 to vector<4x1xf32>
    %13 = arith.divf %11, %12 : vector<4x1xf32>
    %14 = vector.broadcast %13 : vector<4x1xf32> to vector<4x64xf32>
    %15 = arith.subf %9, %14 : vector<4x64xf32>
    %16 = arith.mulf %15, %15 : vector<4x64xf32>
    %cst_12 = arith.constant dense<0.000000e+00> : vector<4xf32>
    %17 = vector.multi_reduction <add>, %16, %cst_12 [1] : vector<4x64xf32> to vector<4xf32>
    %18 = vector.shape_cast %17 : vector<4xf32> to vector<4x1xf32>
    %cst_13 = arith.constant 6.400000e+01 : f32
    %19 = vector.broadcast %cst_13 : f32 to vector<4x1xf32>
    %20 = arith.divf %18, %19 : vector<4x1xf32>
    %21 = vector.broadcast %13 : vector<4x1xf32> to vector<4x64xf32>
    %22 = arith.subf %9, %21 : vector<4x64xf32>
    %cst_14 = arith.constant 9.99999974E-6 : f32
    %23 = vector.broadcast %cst_14 : f32 to vector<4x1xf32>
    %24 = arith.addf %20, %23 : vector<4x1xf32>
    %25 = math.rsqrt %24 : vector<4x1xf32>
    %26 = vector.broadcast %25 : vector<4x1xf32> to vector<4x64xf32>
    %27 = arith.mulf %22, %26 : vector<4x64xf32>
    %28 = vector.broadcast %0 : vector<1x64xf32> to vector<4x64xf32>
    %29 = arith.mulf %27, %28 : vector<4x64xf32>
    %30 = vector.broadcast %1 : vector<1x64xf32> to vector<4x64xf32>
    %31 = arith.addf %29, %30 : vector<4x64xf32>
    %c0_15 = arith.constant 0 : index
    %c1 = arith.constant 1 : index
    %c0_16 = arith.constant 0 : index
    %32 = vector.load %arg7[%c0_15, %c1, %c0_16] : memref<1x5x64xf32, #tpu.memory_space<vmem>>, vector<1x4x64xf32>
    %33 = vector.shape_cast %32 : vector<1x4x64xf32> to vector<4x64xf32>
    %34 = vector.shape_cast %31 : vector<4x64xf32> to vector<1x4x64xf32>
    tpu.vector_store %arg7[%c0_15, %c1, %c0_16], %34 {strides = array<i32>} : memref<1x5x64xf32, #tpu.memory_space<vmem>>, vector<1x4x64xf32>,
    %c0_17 = arith.constant 0 : index
    %c0_18 = arith.constant 0 : index
    %35 = vector.load %arg3[%c0_17, %c0_18] : memref<1x64xf32, #tpu.memory_space<vmem>>, vector<1x64xf32>
    %36 = vector.extract_strided_slice %2 {offsets = [0, 0], sizes = [1, 64], strides = [1, 1]} : vector<5x64xf32> to vector<1x64xf32>
    %37 = arith.addf %35, %36 : vector<1x64xf32>
    %cst_19 = arith.constant dense<0.000000e+00> : vector<1xf32>
    %38 = vector.multi_reduction <add>, %37, %cst_19 [1] : vector<1x64xf32> to vector<1xf32>
    %39 = vector.shape_cast %38 : vector<1xf32> to vector<1x1xf32>
    %cst_20 = arith.constant 6.400000e+01 : f32
    %40 = vector.broadcast %cst_20 : f32 to vector<1x1xf32>
    %41 = arith.divf %39, %40 : vector<1x1xf32>
    %42 = vector.broadcast %41 : vector<1x1xf32> to vector<1x64xf32>
    %43 = arith.subf %37, %42 : vector<1x64xf32>
    %44 = arith.mulf %43, %43 : vector<1x64xf32>
    %cst_21 = arith.constant dense<0.000000e+00> : vector<1xf32>
    %45 = vector.multi_reduction <add>, %44, %cst_21 [1] : vector<1x64xf32> to vector<1xf32>
    %46 = vector.shape_cast %45 : vector<1xf32> to vector<1x1xf32>
    %cst_22 = arith.constant 6.400000e+01 : f32
    %47 = vector.broadcast %cst_22 : f32 to vector<1x1xf32>
    %48 = arith.divf %46, %47 : vector<1x1xf32>
    %49 = vector.broadcast %41 : vector<1x1xf32> to vector<1x64xf32>
    %50 = arith.subf %37, %49 : vector<1x64xf32>
    %cst_23 = arith.constant 9.99999974E-6 : f32
    %51 = vector.broadcast %cst_23 : f32 to vector<1x1xf32>
    %52 = arith.addf %48, %51 : vector<1x1xf32>
    %53 = math.rsqrt %52 : vector<1x1xf32>
    %54 = vector.broadcast %53 : vector<1x1xf32> to vector<1x64xf32>
    %55 = arith.mulf %50, %54 : vector<1x64xf32>
    %56 = arith.mulf %55, %0 : vector<1x64xf32>
    %57 = arith.addf %56, %1 : vector<1x64xf32>
    %c0_24 = arith.constant 0 : index
    %c0_25 = arith.constant 0 : index
    %c0_26 = arith.constant 0 : index
    %58 = vector.load %arg7[%c0_24, %c0_25, %c0_26] : memref<1x5x64xf32, #tpu.memory_space<vmem>>, vector<1x1x64xf32>
    %59 = vector.shape_cast %58 : vector<1x1x64xf32> to vector<1x64xf32>
    %60 = vector.shape_cast %57 : vector<1x64xf32> to vector<1x1x64xf32>
    tpu.vector_store %arg7[%c0_24, %c0_25, %c0_26], %60 {strides = array<i32>} : memref<1x5x64xf32, #tpu.memory_space<vmem>>, vector<1x1x64xf32>,
    return
  }
  func.func @transform_0(%arg0: i32) -> (i32, i32, i32) {
    %c0_i32 = arith.constant 0 : i32
    %c0_i32_0 = arith.constant 0 : i32
    %c0_i32_1 = arith.constant 0 : i32
    return %arg0, %c0_i32, %c0_i32_0 : i32, i32, i32
  }
  func.func @transform_1(%arg0: i32) -> (i32, i32) {
    %c0_i32 = arith.constant 0 : i32
    %c0_i32_0 = arith.constant 0 : i32
    %c0_i32_1 = arith.constant 0 : i32
    return %c0_i32, %c0_i32_0 : i32, i32
  }
  func.func @transform_2(%arg0: i32) -> (i32, i32) {
    %c0_i32 = arith.constant 0 : i32
    %c0_i32_0 = arith.constant 0 : i32
    %c0_i32_1 = arith.constant 0 : i32
    return %c0_i32, %c0_i32_0 : i32, i32
  }
  func.func @transform_3(%arg0: i32) -> (i32, i32) {
    %c0_i32 = arith.constant 0 : i32
    %c0_i32_0 = arith.constant 0 : i32
    %c0_i32_1 = arith.constant 0 : i32
    return %c0_i32, %c0_i32_0 : i32, i32
  }
  func.func @transform_4(%arg0: i32) -> (i32, i32) {
    %c0_i32 = arith.constant 0 : i32
    %c0_i32_0 = arith.constant 0 : i32
    %c0_i32_1 = arith.constant 0 : i32
    return %c0_i32, %c0_i32_0 : i32, i32
  }
  func.func @transform_5(%arg0: i32) -> (i32, i32) {
    %c0_i32 = arith.constant 0 : i32
    %c0_i32_0 = arith.constant 0 : i32
    %c0_i32_1 = arith.constant 0 : i32
    return %c0_i32, %c0_i32_0 : i32, i32
  }
  func.func @transform_6(%arg0: i32) -> (i32, i32, i32) {
    %c0_i32 = arith.constant 0 : i32
    %c0_i32_0 = arith.constant 0 : i32
    %c0_i32_1 = arith.constant 0 : i32
    return %arg0, %c0_i32, %c0_i32_0 : i32, i32, i32
  }
}

module attributes {stable_mosaic.version = 11 : i64} {
  func.func @_attn_block_kernel(%arg0: i32, %arg1: memref<1x5x64xf32, #tpu.memory_space<vmem>>, %arg2: memref<1x64xf32, #tpu.memory_space<vmem>>, %arg3: memref<1x64xf32, #tpu.memory_space<vmem>>, %arg4: memref<64x192xbf16, #tpu.memory_space<vmem>>, %arg5: memref<1x192xf32, #tpu.memory_space<vmem>>, %arg6: memref<64x64xbf16, #tpu.memory_space<vmem>>, %arg7: memref<1x64xf32, #tpu.memory_space<vmem>>, %arg8: memref<1x5x64xf32, #tpu.memory_space<vmem>>) attributes {dimension_semantics = [#tpu.dimension_semantics<parallel>], iteration_bounds = array<i64: 2>, scalar_prefetch = 0 : i64, scratch_operands = 0 : i64, tpu.core_type = #tpu.core_type<tc>, window_params = [{transform_indices = @transform_0, window_bounds = array<i64: 1, 5, 64>}, {pipeline_mode = #tpu.pipeline_mode<synchronous>, transform_indices = @transform_1, window_bounds = array<i64: 1, 64>}, {pipeline_mode = #tpu.pipeline_mode<synchronous>, transform_indices = @transform_2, window_bounds = array<i64: 1, 64>}, {pipeline_mode = #tpu.pipeline_mode<synchronous>, transform_indices = @transform_3, window_bounds = array<i64: 64, 192>}, {pipeline_mode = #tpu.pipeline_mode<synchronous>, transform_indices = @transform_4, window_bounds = array<i64: 1, 192>}, {pipeline_mode = #tpu.pipeline_mode<synchronous>, transform_indices = @transform_5, window_bounds = array<i64: 64, 64>}, {pipeline_mode = #tpu.pipeline_mode<synchronous>, transform_indices = @transform_6, window_bounds = array<i64: 1, 64>}, {transform_indices = @transform_7, window_bounds = array<i64: 1, 5, 64>}]} {
    %c0 = arith.constant 0 : index
    %c0_0 = arith.constant 0 : index
    %c0_1 = arith.constant 0 : index
    %0 = vector.load %arg1[%c0, %c0_0, %c0_1] : memref<1x5x64xf32, #tpu.memory_space<vmem>>, vector<1x5x64xf32>
    %1 = vector.shape_cast %0 : vector<1x5x64xf32> to vector<5x64xf32>
    %c0_2 = arith.constant 0 : index
    %c0_3 = arith.constant 0 : index
    %2 = vector.load %arg2[%c0_2, %c0_3] : memref<1x64xf32, #tpu.memory_space<vmem>>, vector<1x64xf32>
    %c0_4 = arith.constant 0 : index
    %c0_5 = arith.constant 0 : index
    %3 = vector.load %arg3[%c0_4, %c0_5] : memref<1x64xf32, #tpu.memory_space<vmem>>, vector<1x64xf32>
    %cst = arith.constant dense<0.000000e+00> : vector<5xf32>
    %4 = vector.multi_reduction <add>, %1, %cst [1] : vector<5x64xf32> to vector<5xf32>
    %5 = vector.shape_cast %4 : vector<5xf32> to vector<5x1xf32>
    %cst_6 = arith.constant 6.400000e+01 : f32
    %6 = vector.broadcast %cst_6 : f32 to vector<5x1xf32>
    %7 = arith.divf %5, %6 : vector<5x1xf32>
    %8 = vector.broadcast %7 : vector<5x1xf32> to vector<5x64xf32>
    %9 = arith.subf %1, %8 : vector<5x64xf32>
    %10 = arith.mulf %9, %9 : vector<5x64xf32>
    %cst_7 = arith.constant dense<0.000000e+00> : vector<5xf32>
    %11 = vector.multi_reduction <add>, %10, %cst_7 [1] : vector<5x64xf32> to vector<5xf32>
    %12 = vector.shape_cast %11 : vector<5xf32> to vector<5x1xf32>
    %cst_8 = arith.constant 6.400000e+01 : f32
    %13 = vector.broadcast %cst_8 : f32 to vector<5x1xf32>
    %14 = arith.divf %12, %13 : vector<5x1xf32>
    %15 = vector.broadcast %7 : vector<5x1xf32> to vector<5x64xf32>
    %16 = arith.subf %1, %15 : vector<5x64xf32>
    %cst_9 = arith.constant 9.99999974E-6 : f32
    %17 = vector.broadcast %cst_9 : f32 to vector<5x1xf32>
    %18 = arith.addf %14, %17 : vector<5x1xf32>
    %19 = math.rsqrt %18 : vector<5x1xf32>
    %20 = vector.broadcast %19 : vector<5x1xf32> to vector<5x64xf32>
    %21 = arith.mulf %16, %20 : vector<5x64xf32>
    %22 = vector.broadcast %2 : vector<1x64xf32> to vector<5x64xf32>
    %23 = arith.mulf %21, %22 : vector<5x64xf32>
    %24 = vector.broadcast %3 : vector<1x64xf32> to vector<5x64xf32>
    %25 = arith.addf %23, %24 : vector<5x64xf32>
    %26 = arith.truncf %25 : vector<5x64xf32> to vector<5x64xbf16>
    %c0_10 = arith.constant 0 : index
    %c0_11 = arith.constant 0 : index
    %27 = vector.load %arg4[%c0_10, %c0_11] : memref<64x192xbf16, #tpu.memory_space<vmem>>, vector<64x192xbf16>
    %cst_12 = arith.constant dense<0.000000e+00> : vector<5x192xf32>
    %28 = tpu.matmul %26, %27, %cst_12 {dimension_numbers = #tpu.dot_dimension_numbers<[1], [0], [0], [1], [0, 0, 1, 1], [], []>} : vector<5x64xbf16>, vector<64x192xbf16>, vector<5x192xf32> -> vector<5x192xf32>
    %c0_13 = arith.constant 0 : index
    %c0_14 = arith.constant 0 : index
    %29 = vector.load %arg5[%c0_13, %c0_14] : memref<1x192xf32, #tpu.memory_space<vmem>>, vector<1x192xf32>
    %30 = vector.broadcast %29 : vector<1x192xf32> to vector<5x192xf32>
    %31 = arith.addf %28, %30 : vector<5x192xf32>
    %c0_15 = arith.constant 0 : index
    %c0_16 = arith.constant 0 : index
    %32 = vector.load %arg6[%c0_15, %c0_16] : memref<64x64xbf16, #tpu.memory_space<vmem>>, vector<64x64xbf16>
    %33 = vector.extract_strided_slice %31 {offsets = [0, 0], sizes = [5, 16], strides = [1, 1]} : vector<5x192xf32> to vector<5x16xf32>
    %34 = arith.truncf %33 : vector<5x16xf32> to vector<5x16xbf16>
    %35 = vector.extract_strided_slice %31 {offsets = [0, 64], sizes = [5, 16], strides = [1, 1]} : vector<5x192xf32> to vector<5x16xf32>
    %36 = arith.truncf %35 : vector<5x16xf32> to vector<5x16xbf16>
    %37 = vector.extract_strided_slice %31 {offsets = [0, 128], sizes = [5, 16], strides = [1, 1]} : vector<5x192xf32> to vector<5x16xf32>
    %38 = arith.truncf %37 : vector<5x16xf32> to vector<5x16xbf16>
    %cst_17 = arith.constant dense<0.000000e+00> : vector<5x5xf32>
    %39 = tpu.matmul %34, %36, %cst_17 {dimension_numbers = #tpu.dot_dimension_numbers<[1], [1], [0], [0], [0, 0, 1, 0], [], []>} : vector<5x16xbf16>, vector<5x16xbf16>, vector<5x5xf32> -> vector<5x5xf32>
    %cst_18 = arith.constant 2.500000e-01 : f32
    %40 = vector.broadcast %cst_18 : f32 to vector<5x5xf32>
    %41 = arith.mulf %39, %40 : vector<5x5xf32>
    %cst_19 = arith.constant dense<0xFF800000> : vector<5xf32>
    %42 = vector.multi_reduction <maximumf>, %41, %cst_19 [1] : vector<5x5xf32> to vector<5xf32>
    %43 = vector.shape_cast %42 : vector<5xf32> to vector<5x1xf32>
    %44 = vector.broadcast %43 : vector<5x1xf32> to vector<5x5xf32>
    %45 = arith.subf %41, %44 : vector<5x5xf32>
    %46 = math.exp %45 : vector<5x5xf32>
    %cst_20 = arith.constant dense<0.000000e+00> : vector<5xf32>
    %47 = vector.multi_reduction <add>, %46, %cst_20 [1] : vector<5x5xf32> to vector<5xf32>
    %48 = vector.shape_cast %47 : vector<5xf32> to vector<5x1xf32>
    %49 = tpu.reciprocal %48 {approx = true} : vector<5x1xf32> -> vector<5x1xf32>
    %50 = vector.broadcast %49 : vector<5x1xf32> to vector<5x5xf32>
    %51 = arith.mulf %46, %50 : vector<5x5xf32>
    %52 = arith.truncf %51 : vector<5x5xf32> to vector<5x5xbf16>
    %cst_21 = arith.constant dense<0.000000e+00> : vector<5x16xf32>
    %53 = tpu.matmul %52, %38, %cst_21 {dimension_numbers = #tpu.dot_dimension_numbers<[1], [0], [0], [1], [0, 0, 1, 1], [], []>} : vector<5x5xbf16>, vector<5x16xbf16>, vector<5x16xf32> -> vector<5x16xf32>
    %54 = arith.truncf %53 : vector<5x16xf32> to vector<5x16xbf16>
    %55 = vector.extract_strided_slice %32 {offsets = [0, 0], sizes = [16, 64], strides = [1, 1]} : vector<64x64xbf16> to vector<16x64xbf16>
    %cst_22 = arith.constant dense<0.000000e+00> : vector<5x64xf32>
    %56 = tpu.matmul %54, %55, %cst_22 {dimension_numbers = #tpu.dot_dimension_numbers<[1], [0], [0], [1], [0, 0, 1, 1], [], []>} : vector<5x16xbf16>, vector<16x64xbf16>, vector<5x64xf32> -> vector<5x64xf32>
    %57 = vector.extract_strided_slice %31 {offsets = [0, 16], sizes = [5, 16], strides = [1, 1]} : vector<5x192xf32> to vector<5x16xf32>
    %58 = arith.truncf %57 : vector<5x16xf32> to vector<5x16xbf16>
    %59 = vector.extract_strided_slice %31 {offsets = [0, 80], sizes = [5, 16], strides = [1, 1]} : vector<5x192xf32> to vector<5x16xf32>
    %60 = arith.truncf %59 : vector<5x16xf32> to vector<5x16xbf16>
    %61 = vector.extract_strided_slice %31 {offsets = [0, 144], sizes = [5, 16], strides = [1, 1]} : vector<5x192xf32> to vector<5x16xf32>
    %62 = arith.truncf %61 : vector<5x16xf32> to vector<5x16xbf16>
    %cst_23 = arith.constant dense<0.000000e+00> : vector<5x5xf32>
    %63 = tpu.matmul %58, %60, %cst_23 {dimension_numbers = #tpu.dot_dimension_numbers<[1], [1], [0], [0], [0, 0, 1, 0], [], []>} : vector<5x16xbf16>, vector<5x16xbf16>, vector<5x5xf32> -> vector<5x5xf32>
    %cst_24 = arith.constant 2.500000e-01 : f32
    %64 = vector.broadcast %cst_24 : f32 to vector<5x5xf32>
    %65 = arith.mulf %63, %64 : vector<5x5xf32>
    %cst_25 = arith.constant dense<0xFF800000> : vector<5xf32>
    %66 = vector.multi_reduction <maximumf>, %65, %cst_25 [1] : vector<5x5xf32> to vector<5xf32>
    %67 = vector.shape_cast %66 : vector<5xf32> to vector<5x1xf32>
    %68 = vector.broadcast %67 : vector<5x1xf32> to vector<5x5xf32>
    %69 = arith.subf %65, %68 : vector<5x5xf32>
    %70 = math.exp %69 : vector<5x5xf32>
    %cst_26 = arith.constant dense<0.000000e+00> : vector<5xf32>
    %71 = vector.multi_reduction <add>, %70, %cst_26 [1] : vector<5x5xf32> to vector<5xf32>
    %72 = vector.shape_cast %71 : vector<5xf32> to vector<5x1xf32>
    %73 = tpu.reciprocal %72 {approx = true} : vector<5x1xf32> -> vector<5x1xf32>
    %74 = vector.broadcast %73 : vector<5x1xf32> to vector<5x5xf32>
    %75 = arith.mulf %70, %74 : vector<5x5xf32>
    %76 = arith.truncf %75 : vector<5x5xf32> to vector<5x5xbf16>
    %cst_27 = arith.constant dense<0.000000e+00> : vector<5x16xf32>
    %77 = tpu.matmul %76, %62, %cst_27 {dimension_numbers = #tpu.dot_dimension_numbers<[1], [0], [0], [1], [0, 0, 1, 1], [], []>} : vector<5x5xbf16>, vector<5x16xbf16>, vector<5x16xf32> -> vector<5x16xf32>
    %78 = arith.truncf %77 : vector<5x16xf32> to vector<5x16xbf16>
    %79 = vector.extract_strided_slice %32 {offsets = [16, 0], sizes = [16, 64], strides = [1, 1]} : vector<64x64xbf16> to vector<16x64xbf16>
    %cst_28 = arith.constant dense<0.000000e+00> : vector<5x64xf32>
    %80 = tpu.matmul %78, %79, %cst_28 {dimension_numbers = #tpu.dot_dimension_numbers<[1], [0], [0], [1], [0, 0, 1, 1], [], []>} : vector<5x16xbf16>, vector<16x64xbf16>, vector<5x64xf32> -> vector<5x64xf32>
    %81 = arith.addf %56, %80 : vector<5x64xf32>
    %82 = vector.extract_strided_slice %31 {offsets = [0, 32], sizes = [5, 16], strides = [1, 1]} : vector<5x192xf32> to vector<5x16xf32>
    %83 = arith.truncf %82 : vector<5x16xf32> to vector<5x16xbf16>
    %84 = vector.extract_strided_slice %31 {offsets = [0, 96], sizes = [5, 16], strides = [1, 1]} : vector<5x192xf32> to vector<5x16xf32>
    %85 = arith.truncf %84 : vector<5x16xf32> to vector<5x16xbf16>
    %86 = vector.extract_strided_slice %31 {offsets = [0, 160], sizes = [5, 16], strides = [1, 1]} : vector<5x192xf32> to vector<5x16xf32>
    %87 = arith.truncf %86 : vector<5x16xf32> to vector<5x16xbf16>
    %cst_29 = arith.constant dense<0.000000e+00> : vector<5x5xf32>
    %88 = tpu.matmul %83, %85, %cst_29 {dimension_numbers = #tpu.dot_dimension_numbers<[1], [1], [0], [0], [0, 0, 1, 0], [], []>} : vector<5x16xbf16>, vector<5x16xbf16>, vector<5x5xf32> -> vector<5x5xf32>
    %cst_30 = arith.constant 2.500000e-01 : f32
    %89 = vector.broadcast %cst_30 : f32 to vector<5x5xf32>
    %90 = arith.mulf %88, %89 : vector<5x5xf32>
    %cst_31 = arith.constant dense<0xFF800000> : vector<5xf32>
    %91 = vector.multi_reduction <maximumf>, %90, %cst_31 [1] : vector<5x5xf32> to vector<5xf32>
    %92 = vector.shape_cast %91 : vector<5xf32> to vector<5x1xf32>
    %93 = vector.broadcast %92 : vector<5x1xf32> to vector<5x5xf32>
    %94 = arith.subf %90, %93 : vector<5x5xf32>
    %95 = math.exp %94 : vector<5x5xf32>
    %cst_32 = arith.constant dense<0.000000e+00> : vector<5xf32>
    %96 = vector.multi_reduction <add>, %95, %cst_32 [1] : vector<5x5xf32> to vector<5xf32>
    %97 = vector.shape_cast %96 : vector<5xf32> to vector<5x1xf32>
    %98 = tpu.reciprocal %97 {approx = true} : vector<5x1xf32> -> vector<5x1xf32>
    %99 = vector.broadcast %98 : vector<5x1xf32> to vector<5x5xf32>
    %100 = arith.mulf %95, %99 : vector<5x5xf32>
    %101 = arith.truncf %100 : vector<5x5xf32> to vector<5x5xbf16>
    %cst_33 = arith.constant dense<0.000000e+00> : vector<5x16xf32>
    %102 = tpu.matmul %101, %87, %cst_33 {dimension_numbers = #tpu.dot_dimension_numbers<[1], [0], [0], [1], [0, 0, 1, 1], [], []>} : vector<5x5xbf16>, vector<5x16xbf16>, vector<5x16xf32> -> vector<5x16xf32>
    %103 = arith.truncf %102 : vector<5x16xf32> to vector<5x16xbf16>
    %104 = vector.extract_strided_slice %32 {offsets = [32, 0], sizes = [16, 64], strides = [1, 1]} : vector<64x64xbf16> to vector<16x64xbf16>
    %cst_34 = arith.constant dense<0.000000e+00> : vector<5x64xf32>
    %105 = tpu.matmul %103, %104, %cst_34 {dimension_numbers = #tpu.dot_dimension_numbers<[1], [0], [0], [1], [0, 0, 1, 1], [], []>} : vector<5x16xbf16>, vector<16x64xbf16>, vector<5x64xf32> -> vector<5x64xf32>
    %106 = arith.addf %81, %105 : vector<5x64xf32>
    %107 = vector.extract_strided_slice %31 {offsets = [0, 48], sizes = [5, 16], strides = [1, 1]} : vector<5x192xf32> to vector<5x16xf32>
    %108 = arith.truncf %107 : vector<5x16xf32> to vector<5x16xbf16>
    %109 = vector.extract_strided_slice %31 {offsets = [0, 112], sizes = [5, 16], strides = [1, 1]} : vector<5x192xf32> to vector<5x16xf32>
    %110 = arith.truncf %109 : vector<5x16xf32> to vector<5x16xbf16>
    %111 = vector.extract_strided_slice %31 {offsets = [0, 176], sizes = [5, 16], strides = [1, 1]} : vector<5x192xf32> to vector<5x16xf32>
    %112 = arith.truncf %111 : vector<5x16xf32> to vector<5x16xbf16>
    %cst_35 = arith.constant dense<0.000000e+00> : vector<5x5xf32>
    %113 = tpu.matmul %108, %110, %cst_35 {dimension_numbers = #tpu.dot_dimension_numbers<[1], [1], [0], [0], [0, 0, 1, 0], [], []>} : vector<5x16xbf16>, vector<5x16xbf16>, vector<5x5xf32> -> vector<5x5xf32>
    %cst_36 = arith.constant 2.500000e-01 : f32
    %114 = vector.broadcast %cst_36 : f32 to vector<5x5xf32>
    %115 = arith.mulf %113, %114 : vector<5x5xf32>
    %cst_37 = arith.constant dense<0xFF800000> : vector<5xf32>
    %116 = vector.multi_reduction <maximumf>, %115, %cst_37 [1] : vector<5x5xf32> to vector<5xf32>
    %117 = vector.shape_cast %116 : vector<5xf32> to vector<5x1xf32>
    %118 = vector.broadcast %117 : vector<5x1xf32> to vector<5x5xf32>
    %119 = arith.subf %115, %118 : vector<5x5xf32>
    %120 = math.exp %119 : vector<5x5xf32>
    %cst_38 = arith.constant dense<0.000000e+00> : vector<5xf32>
    %121 = vector.multi_reduction <add>, %120, %cst_38 [1] : vector<5x5xf32> to vector<5xf32>
    %122 = vector.shape_cast %121 : vector<5xf32> to vector<5x1xf32>
    %123 = tpu.reciprocal %122 {approx = true} : vector<5x1xf32> -> vector<5x1xf32>
    %124 = vector.broadcast %123 : vector<5x1xf32> to vector<5x5xf32>
    %125 = arith.mulf %120, %124 : vector<5x5xf32>
    %126 = arith.truncf %125 : vector<5x5xf32> to vector<5x5xbf16>
    %cst_39 = arith.constant dense<0.000000e+00> : vector<5x16xf32>
    %127 = tpu.matmul %126, %112, %cst_39 {dimension_numbers = #tpu.dot_dimension_numbers<[1], [0], [0], [1], [0, 0, 1, 1], [], []>} : vector<5x5xbf16>, vector<5x16xbf16>, vector<5x16xf32> -> vector<5x16xf32>
    %128 = arith.truncf %127 : vector<5x16xf32> to vector<5x16xbf16>
    %129 = vector.extract_strided_slice %32 {offsets = [48, 0], sizes = [16, 64], strides = [1, 1]} : vector<64x64xbf16> to vector<16x64xbf16>
    %cst_40 = arith.constant dense<0.000000e+00> : vector<5x64xf32>
    %130 = tpu.matmul %128, %129, %cst_40 {dimension_numbers = #tpu.dot_dimension_numbers<[1], [0], [0], [1], [0, 0, 1, 1], [], []>} : vector<5x16xbf16>, vector<16x64xbf16>, vector<5x64xf32> -> vector<5x64xf32>
    %131 = arith.addf %106, %130 : vector<5x64xf32>
    %c0_41 = arith.constant 0 : index
    %c0_42 = arith.constant 0 : index
    %132 = vector.load %arg7[%c0_41, %c0_42] : memref<1x64xf32, #tpu.memory_space<vmem>>, vector<1x64xf32>
    %133 = vector.broadcast %132 : vector<1x64xf32> to vector<5x64xf32>
    %134 = arith.addf %131, %133 : vector<5x64xf32>
    %135 = arith.addf %1, %134 : vector<5x64xf32>
    %c0_43 = arith.constant 0 : index
    %c0_44 = arith.constant 0 : index
    %c0_45 = arith.constant 0 : index
    %136 = vector.load %arg8[%c0_43, %c0_44, %c0_45] : memref<1x5x64xf32, #tpu.memory_space<vmem>>, vector<1x5x64xf32>
    %137 = vector.shape_cast %136 : vector<1x5x64xf32> to vector<5x64xf32>
    %138 = vector.shape_cast %135 : vector<5x64xf32> to vector<1x5x64xf32>
    tpu.vector_store %arg8[%c0_43, %c0_44, %c0_45], %138 {strides = array<i32>} : memref<1x5x64xf32, #tpu.memory_space<vmem>>, vector<1x5x64xf32>,
    return
  }
  func.func @transform_0(%arg0: i32) -> (i32, i32, i32) {
    %c0_i32 = arith.constant 0 : i32
    %c0_i32_0 = arith.constant 0 : i32
    %c0_i32_1 = arith.constant 0 : i32
    return %arg0, %c0_i32, %c0_i32_0 : i32, i32, i32
  }
  func.func @transform_1(%arg0: i32) -> (i32, i32) {
    %c0_i32 = arith.constant 0 : i32
    %c0_i32_0 = arith.constant 0 : i32
    %c0_i32_1 = arith.constant 0 : i32
    return %c0_i32, %c0_i32_0 : i32, i32
  }
  func.func @transform_2(%arg0: i32) -> (i32, i32) {
    %c0_i32 = arith.constant 0 : i32
    %c0_i32_0 = arith.constant 0 : i32
    %c0_i32_1 = arith.constant 0 : i32
    return %c0_i32, %c0_i32_0 : i32, i32
  }
  func.func @transform_3(%arg0: i32) -> (i32, i32) {
    %c0_i32 = arith.constant 0 : i32
    %c0_i32_0 = arith.constant 0 : i32
    %c0_i32_1 = arith.constant 0 : i32
    return %c0_i32, %c0_i32_0 : i32, i32
  }
  func.func @transform_4(%arg0: i32) -> (i32, i32) {
    %c0_i32 = arith.constant 0 : i32
    %c0_i32_0 = arith.constant 0 : i32
    %c0_i32_1 = arith.constant 0 : i32
    return %c0_i32, %c0_i32_0 : i32, i32
  }
  func.func @transform_5(%arg0: i32) -> (i32, i32) {
    %c0_i32 = arith.constant 0 : i32
    %c0_i32_0 = arith.constant 0 : i32
    %c0_i32_1 = arith.constant 0 : i32
    return %c0_i32, %c0_i32_0 : i32, i32
  }
  func.func @transform_6(%arg0: i32) -> (i32, i32) {
    %c0_i32 = arith.constant 0 : i32
    %c0_i32_0 = arith.constant 0 : i32
    %c0_i32_1 = arith.constant 0 : i32
    return %c0_i32, %c0_i32_0 : i32, i32
  }
  func.func @transform_7(%arg0: i32) -> (i32, i32, i32) {
    %c0_i32 = arith.constant 0 : i32
    %c0_i32_0 = arith.constant 0 : i32
    %c0_i32_1 = arith.constant 0 : i32
    return %arg0, %c0_i32, %c0_i32_0 : i32, i32, i32
  }
}

module attributes {stable_mosaic.version = 11 : i64} {
  func.func @_mlp_block_kernel(%arg0: i32, %arg1: memref<1x5x64xf32, #tpu.memory_space<vmem>>, %arg2: memref<1x64xf32, #tpu.memory_space<vmem>>, %arg3: memref<1x64xf32, #tpu.memory_space<vmem>>, %arg4: memref<64x128xbf16, #tpu.memory_space<vmem>>, %arg5: memref<1x128xf32, #tpu.memory_space<vmem>>, %arg6: memref<128x64xbf16, #tpu.memory_space<vmem>>, %arg7: memref<1x64xf32, #tpu.memory_space<vmem>>, %arg8: memref<1x5x64xf32, #tpu.memory_space<vmem>>) attributes {dimension_semantics = [#tpu.dimension_semantics<parallel>], iteration_bounds = array<i64: 2>, scalar_prefetch = 0 : i64, scratch_operands = 0 : i64, tpu.core_type = #tpu.core_type<tc>, window_params = [{transform_indices = @transform_0, window_bounds = array<i64: 1, 5, 64>}, {pipeline_mode = #tpu.pipeline_mode<synchronous>, transform_indices = @transform_1, window_bounds = array<i64: 1, 64>}, {pipeline_mode = #tpu.pipeline_mode<synchronous>, transform_indices = @transform_2, window_bounds = array<i64: 1, 64>}, {pipeline_mode = #tpu.pipeline_mode<synchronous>, transform_indices = @transform_3, window_bounds = array<i64: 64, 128>}, {pipeline_mode = #tpu.pipeline_mode<synchronous>, transform_indices = @transform_4, window_bounds = array<i64: 1, 128>}, {pipeline_mode = #tpu.pipeline_mode<synchronous>, transform_indices = @transform_5, window_bounds = array<i64: 128, 64>}, {pipeline_mode = #tpu.pipeline_mode<synchronous>, transform_indices = @transform_6, window_bounds = array<i64: 1, 64>}, {transform_indices = @transform_7, window_bounds = array<i64: 1, 5, 64>}]} {
    %c0 = arith.constant 0 : index
    %c0_0 = arith.constant 0 : index
    %c0_1 = arith.constant 0 : index
    %0 = vector.load %arg1[%c0, %c0_0, %c0_1] : memref<1x5x64xf32, #tpu.memory_space<vmem>>, vector<1x5x64xf32>
    %1 = vector.shape_cast %0 : vector<1x5x64xf32> to vector<5x64xf32>
    %c0_2 = arith.constant 0 : index
    %c0_3 = arith.constant 0 : index
    %2 = vector.load %arg2[%c0_2, %c0_3] : memref<1x64xf32, #tpu.memory_space<vmem>>, vector<1x64xf32>
    %c0_4 = arith.constant 0 : index
    %c0_5 = arith.constant 0 : index
    %3 = vector.load %arg3[%c0_4, %c0_5] : memref<1x64xf32, #tpu.memory_space<vmem>>, vector<1x64xf32>
    %cst = arith.constant dense<0.000000e+00> : vector<5xf32>
    %4 = vector.multi_reduction <add>, %1, %cst [1] : vector<5x64xf32> to vector<5xf32>
    %5 = vector.shape_cast %4 : vector<5xf32> to vector<5x1xf32>
    %cst_6 = arith.constant 6.400000e+01 : f32
    %6 = vector.broadcast %cst_6 : f32 to vector<5x1xf32>
    %7 = arith.divf %5, %6 : vector<5x1xf32>
    %8 = vector.broadcast %7 : vector<5x1xf32> to vector<5x64xf32>
    %9 = arith.subf %1, %8 : vector<5x64xf32>
    %10 = arith.mulf %9, %9 : vector<5x64xf32>
    %cst_7 = arith.constant dense<0.000000e+00> : vector<5xf32>
    %11 = vector.multi_reduction <add>, %10, %cst_7 [1] : vector<5x64xf32> to vector<5xf32>
    %12 = vector.shape_cast %11 : vector<5xf32> to vector<5x1xf32>
    %cst_8 = arith.constant 6.400000e+01 : f32
    %13 = vector.broadcast %cst_8 : f32 to vector<5x1xf32>
    %14 = arith.divf %12, %13 : vector<5x1xf32>
    %15 = vector.broadcast %7 : vector<5x1xf32> to vector<5x64xf32>
    %16 = arith.subf %1, %15 : vector<5x64xf32>
    %cst_9 = arith.constant 9.99999974E-6 : f32
    %17 = vector.broadcast %cst_9 : f32 to vector<5x1xf32>
    %18 = arith.addf %14, %17 : vector<5x1xf32>
    %19 = math.rsqrt %18 : vector<5x1xf32>
    %20 = vector.broadcast %19 : vector<5x1xf32> to vector<5x64xf32>
    %21 = arith.mulf %16, %20 : vector<5x64xf32>
    %22 = vector.broadcast %2 : vector<1x64xf32> to vector<5x64xf32>
    %23 = arith.mulf %21, %22 : vector<5x64xf32>
    %24 = vector.broadcast %3 : vector<1x64xf32> to vector<5x64xf32>
    %25 = arith.addf %23, %24 : vector<5x64xf32>
    %26 = arith.truncf %25 : vector<5x64xf32> to vector<5x64xbf16>
    %c0_10 = arith.constant 0 : index
    %c0_11 = arith.constant 0 : index
    %27 = vector.load %arg4[%c0_10, %c0_11] : memref<64x128xbf16, #tpu.memory_space<vmem>>, vector<64x128xbf16>
    %cst_12 = arith.constant dense<0.000000e+00> : vector<5x128xf32>
    %28 = tpu.matmul %26, %27, %cst_12 {dimension_numbers = #tpu.dot_dimension_numbers<[1], [0], [0], [1], [0, 0, 1, 1], [], []>} : vector<5x64xbf16>, vector<64x128xbf16>, vector<5x128xf32> -> vector<5x128xf32>
    %c0_13 = arith.constant 0 : index
    %c0_14 = arith.constant 0 : index
    %29 = vector.load %arg5[%c0_13, %c0_14] : memref<1x128xf32, #tpu.memory_space<vmem>>, vector<1x128xf32>
    %30 = vector.broadcast %29 : vector<1x128xf32> to vector<5x128xf32>
    %31 = arith.addf %28, %30 : vector<5x128xf32>
    %cst_15 = arith.constant 1.702000e+00 : f32
    %32 = vector.broadcast %cst_15 : f32 to vector<5x128xf32>
    %33 = arith.mulf %32, %31 : vector<5x128xf32>
    %34 = arith.negf %33 : vector<5x128xf32>
    %35 = math.exp %34 : vector<5x128xf32>
    %cst_16 = arith.constant 1.000000e+00 : f32
    %36 = vector.broadcast %cst_16 : f32 to vector<5x128xf32>
    %37 = arith.addf %36, %35 : vector<5x128xf32>
    %38 = arith.divf %36, %37 : vector<5x128xf32>
    %39 = arith.mulf %31, %38 : vector<5x128xf32>
    %40 = arith.truncf %39 : vector<5x128xf32> to vector<5x128xbf16>
    %c0_17 = arith.constant 0 : index
    %c0_18 = arith.constant 0 : index
    %41 = vector.load %arg6[%c0_17, %c0_18] : memref<128x64xbf16, #tpu.memory_space<vmem>>, vector<128x64xbf16>
    %cst_19 = arith.constant dense<0.000000e+00> : vector<5x64xf32>
    %42 = tpu.matmul %40, %41, %cst_19 {dimension_numbers = #tpu.dot_dimension_numbers<[1], [0], [0], [1], [0, 0, 1, 1], [], []>} : vector<5x128xbf16>, vector<128x64xbf16>, vector<5x64xf32> -> vector<5x64xf32>
    %c0_20 = arith.constant 0 : index
    %c0_21 = arith.constant 0 : index
    %43 = vector.load %arg7[%c0_20, %c0_21] : memref<1x64xf32, #tpu.memory_space<vmem>>, vector<1x64xf32>
    %44 = vector.broadcast %43 : vector<1x64xf32> to vector<5x64xf32>
    %45 = arith.addf %42, %44 : vector<5x64xf32>
    %46 = arith.addf %1, %45 : vector<5x64xf32>
    %c0_22 = arith.constant 0 : index
    %c0_23 = arith.constant 0 : index
    %c0_24 = arith.constant 0 : index
    %47 = vector.load %arg8[%c0_22, %c0_23, %c0_24] : memref<1x5x64xf32, #tpu.memory_space<vmem>>, vector<1x5x64xf32>
    %48 = vector.shape_cast %47 : vector<1x5x64xf32> to vector<5x64xf32>
    %49 = vector.shape_cast %46 : vector<5x64xf32> to vector<1x5x64xf32>
    tpu.vector_store %arg8[%c0_22, %c0_23, %c0_24], %49 {strides = array<i32>} : memref<1x5x64xf32, #tpu.memory_space<vmem>>, vector<1x5x64xf32>,
    return
  }
  func.func @transform_0(%arg0: i32) -> (i32, i32, i32) {
    %c0_i32 = arith.constant 0 : i32
    %c0_i32_0 = arith.constant 0 : i32
    %c0_i32_1 = arith.constant 0 : i32
    return %arg0, %c0_i32, %c0_i32_0 : i32, i32, i32
  }
  func.func @transform_1(%arg0: i32) -> (i32, i32) {
    %c0_i32 = arith.constant 0 : i32
    %c0_i32_0 = arith.constant 0 : i32
    %c0_i32_1 = arith.constant 0 : i32
    return %c0_i32, %c0_i32_0 : i32, i32
  }
  func.func @transform_2(%arg0: i32) -> (i32, i32) {
    %c0_i32 = arith.constant 0 : i32
    %c0_i32_0 = arith.constant 0 : i32
    %c0_i32_1 = arith.constant 0 : i32
    return %c0_i32, %c0_i32_0 : i32, i32
  }
  func.func @transform_3(%arg0: i32) -> (i32, i32) {
    %c0_i32 = arith.constant 0 : i32
    %c0_i32_0 = arith.constant 0 : i32
    %c0_i32_1 = arith.constant 0 : i32
    return %c0_i32, %c0_i32_0 : i32, i32
  }
  func.func @transform_4(%arg0: i32) -> (i32, i32) {
    %c0_i32 = arith.constant 0 : i32
    %c0_i32_0 = arith.constant 0 : i32
    %c0_i32_1 = arith.constant 0 : i32
    return %c0_i32, %c0_i32_0 : i32, i32
  }
  func.func @transform_5(%arg0: i32) -> (i32, i32) {
    %c0_i32 = arith.constant 0 : i32
    %c0_i32_0 = arith.constant 0 : i32
    %c0_i32_1 = arith.constant 0 : i32
    return %c0_i32, %c0_i32_0 : i32, i32
  }
  func.func @transform_6(%arg0: i32) -> (i32, i32) {
    %c0_i32 = arith.constant 0 : i32
    %c0_i32_0 = arith.constant 0 : i32
    %c0_i32_1 = arith.constant 0 : i32
    return %c0_i32, %c0_i32_0 : i32, i32
  }
  func.func @transform_7(%arg0: i32) -> (i32, i32, i32) {
    %c0_i32 = arith.constant 0 : i32
    %c0_i32_0 = arith.constant 0 : i32
    %c0_i32_1 = arith.constant 0 : i32
    return %arg0, %c0_i32, %c0_i32_0 : i32, i32, i32
  }
}

</mosaic_0001>

<llo_original>
// kernel: _lambda_.5
$region0: #{_lambda_.5}
  #allocation0 [shape = 'u32[]', space=smem, size = 0x4, offset = 0x4, fixed_abs, tag = 'smem constant byte address 0x4 - core index']
  #allocation1 [shape = 'u32[144,128]{1,0:T(1,128)}', space=vmem, size = 0x12000, scoped, tag = 'internal scratch']
  %s0 = inlined_call_operand.vmem [shape: f32[2,4,192], index: 0, kind: input, shape index: {}]
  %s1 = inlined_call_operand.vmem [shape: bf16[192,64], index: 1, kind: input, shape index: {}]
  %s2 = inlined_call_operand.vmem [shape: f32[1,64], index: 2, kind: input, shape index: {}]
  %s3 = inlined_call_operand.vmem [shape: f32[5,64], index: 3, kind: input, shape index: {}]
  %s4 = inlined_call_operand.vmem [shape: f32[1,64], index: 4, kind: input, shape index: {}]
  %s5 = inlined_call_operand.vmem [shape: f32[1,64], index: 5, kind: input, shape index: {}]
  %s6 = inlined_call_operand.vmem [shape: f32[2,5,64], index: 6, kind: output, shape index: {}]
  %s7 = sld [smem:[#allocation0]]
  $region57: #{_lambda_.5} parent=0
    _
  %s9 = ssub.s32 1, %s7
  %s10 = scalar_select 0, %s9, %s7
  loop: start=0, step=1, limit=4
  $region2: #{_lambda_.5} parent=0 // loop_pre_header
    _
  $region3: #{_lambda_.5} parent=0 // loop_header
    %s12 = sphi 0, %s16
    %p13 = scmp.ge.s32.totalorder %s12, 4
    %s22 = sphi 0, %s24
    %s25 = sphi 0, %s22
    %s26 = sphi 0, %s25
    %s42 = sphi 0, %s26
    %s46 = sphi 0, %s46
    %s48 = sphi 0, %s46
    %s49 = sphi 0, %s48
    %s63 = sphi 0, %s49
    %s67 = sphi 0, %s67
    %s69 = sphi 0, %s67
    %s70 = sphi 0, %s69
    %s84 = sphi 0, %s70
    %s88 = sphi 0, %s88
    %s90 = sphi 0, %s88
    %s91 = sphi 0, %s90
    %s105 = sphi 0, %s91
    %s109 = sphi 0, %s109
    %s111 = sphi 0, %s109
    %s112 = sphi 0, %s111
    %s126 = sphi 0, %s112
    %s130 = sphi 0, %s130
    %s132 = sphi 0, %s130
    %s133 = sphi 0, %s132
    %s147 = sphi 0, %s133
    %s153 = sphi 0, %s155
    %s156 = sphi 0, %s153
    %s157 = sphi 0, %s156
    %s173 = sphi 0, %s157
  $region4: #{_lambda_.5} parent=0 // loop_header_branch
    %15 = sbr.rel (%p13) target = $region8
  $region5: #{_lambda_.5} parent=0 // loop_body
    %s17 = ssub.s32 %s12, 1
    %s18 = ssub.s32 %s12, 2
    %s19 = sadd.s32 %s12, 1
    %s20 = ssub.s32 %s12, %s19
    %p21 = scmp.eq.s32.totalorder %s20, 0
    %s23 = sadd.s32 %s22, 1
    %s24 = scalar_select %p21, %s22, %s23
    %p27 = pneg %p21
    %p28 = scmp.eq.s32.totalorder %s12, 1
    %p29 = por %p27, %p28
    %p30 = scmp.ne.s32.totalorder %s22, %s25
    %p31 = scmp.eq.s32.totalorder %s12, 0
    %p32 = por %p30, %p31
    %p33 = scmp.ne.s32.totalorder %s22, %s25
    %p34 = scmp.eq.s32.totalorder %s17, 1
    %p35 = por %p33, %p34
    %p36 = scmp.ne.s32.totalorder %s25, %s26
    %p37 = scmp.eq.s32.totalorder %s17, 0
    %p38 = por %p36, %p37
    %p39 = scmp.ne.s32.totalorder %s25, %s26
    %p40 = scmp.eq.s32.totalorder %s18, 1
    %p41 = por %p39, %p40
    %p43 = scmp.ne.s32.totalorder %s26, %s42
    %p44 = scmp.eq.s32.totalorder %s18, 0
    %p45 = por %p43, %p44
    %s47 = sadd.s32 %s46, 1
    %p50 = scmp.eq.s32.totalorder %s12, 1
    %p51 = scmp.ne.s32.totalorder %s46, %s48
    %p52 = scmp.eq.s32.totalorder %s12, 0
    %p53 = por %p51, %p52
    %p54 = scmp.ne.s32.totalorder %s46, %s48
    %p55 = scmp.eq.s32.totalorder %s17, 1
    %p56 = por %p54, %p55
    %p57 = scmp.ne.s32.totalorder %s48, %s49
    %p58 = scmp.eq.s32.totalorder %s17, 0
    %p59 = por %p57, %p58
    %p60 = scmp.ne.s32.totalorder %s48, %s49
    %p61 = scmp.eq.s32.totalorder %s18, 1
    %p62 = por %p60, %p61
    %p64 = scmp.ne.s32.totalorder %s49, %s63
    %p65 = scmp.eq.s32.totalorder %s18, 0
    %p66 = por %p64, %p65
    %s68 = sadd.s32 %s67, 1
    %p71 = scmp.eq.s32.totalorder %s12, 1
    %p72 = scmp.ne.s32.totalorder %s67, %s69
    %p73 = scmp.eq.s32.totalorder %s12, 0
    %p74 = por %p72, %p73
    %p75 = scmp.ne.s32.totalorder %s67, %s69
    %p76 = scmp.eq.s32.totalorder %s17, 1
    %p77 = por %p75, %p76
    %p78 = scmp.ne.s32.totalorder %s69, %s70
    %p79 = scmp.eq.s32.totalorder %s17, 0
    %p80 = por %p78, %p79
    %p81 = scmp.ne.s32.totalorder %s69, %s70
    %p82 = scmp.eq.s32.totalorder %s18, 1
    %p83 = por %p81, %p82
    %p85 = scmp.ne.s32.totalorder %s70, %s84
    %p86 = scmp.eq.s32.totalorder %s18, 0
    %p87 = por %p85, %p86
    %s89 = sadd.s32 %s88, 1
    %p92 = scmp.eq.s32.totalorder %s12, 1
    %p93 = scmp.ne.s32.totalorder %s88, %s90
    %p94 = scmp.eq.s32.totalorder %s12, 0
    %p95 = por %p93, %p94
    %p96 = scmp.ne.s32.totalorder %s88, %s90
    %p97 = scmp.eq.s32.totalorder %s17, 1
    %p98 = por %p96, %p97
    %p99 = scmp.ne.s32.totalorder %s90, %s91
    %p100 = scmp.eq.s32.totalorder %s17, 0
    %p101 = por %p99, %p100
    %p102 = scmp.ne.s32.totalorder %s90, %s91
    %p103 = scmp.eq.s32.totalorder %s18, 1
    %p104 = por %p102, %p103
    %p106 = scmp.ne.s32.totalorder %s91, %s105
    %p107 = scmp.eq.s32.totalorder %s18, 0
    %p108 = por %p106, %p107
    %s110 = sadd.s32 %s109, 1
    %p113 = scmp.eq.s32.totalorder %s12, 1
    %p114 = scmp.ne.s32.totalorder %s109, %s111
    %p115 = scmp.eq.s32.totalorder %s12, 0
    %p116 = por %p114, %p115
    %p117 = scmp.ne.s32.totalorder %s109, %s111
    %p118 = scmp.eq.s32.totalorder %s17, 1
    %p119 = por %p117, %p118
    %p120 = scmp.ne.s32.totalorder %s111, %s112
    %p121 = scmp.eq.s32.totalorder %s17, 0
    %p122 = por %p120, %p121
    %p123 = scmp.ne.s32.totalorder %s111, %s112
    %p124 = scmp.eq.s32.totalorder %s18, 1
    %p125 = por %p123, %p124
    %p127 = scmp.ne.s32.totalorder %s112, %s126
    %p128 = scmp.eq.s32.totalorder %s18, 0
    %p129 = por %p127, %p128
    %s131 = sadd.s32 %s130, 1
    %p134 = scmp.eq.s32.totalorder %s12, 1
    %p135 = scmp.ne.s32.totalorder %s130, %s132
    %p136 = scmp.eq.s32.totalorder %s12, 0
    %p137 = por %p135, %p136
    %p138 = scmp.ne.s32.totalorder %s130, %s132
    %p139 = scmp.eq.s32.totalorder %s17, 1
    %p140 = por %p138, %p139
    %p141 = scmp.ne.s32.totalorder %s132, %s133
    %p142 = scmp.eq.s32.totalorder %s17, 0
    %p143 = por %p141, %p142
    %p144 = scmp.ne.s32.totalorder %s132, %s133
    %p145 = scmp.eq.s32.totalorder %s18, 1
    %p146 = por %p144, %p145
    %p148 = scmp.ne.s32.totalorder %s133, %s147
    %p149 = scmp.eq.s32.totalorder %s18, 0
    %p150 = por %p148, %p149
    %s151 = ssub.s32 %s12, %s19
    %p152 = scmp.eq.s32.totalorder %s151, 0
    %s154 = sadd.s32 %s153, 1
    %s155 = scalar_select %p152, %s153, %s154
    %p158 = pneg %p152
    %p159 = scmp.eq.s32.totalorder %s12, 1
    %p160 = por %p158, %p159
    %p161 = scmp.ne.s32.totalorder %s153, %s156
    %p162 = scmp.eq.s32.totalorder %s12, 0
    %p163 = por %p161, %p162
    %p164 = scmp.ne.s32.totalorder %s153, %s156
    %p165 = scmp.eq.s32.totalorder %s17, 1
    %p166 = por %p164, %p165
    %p167 = scmp.ne.s32.totalorder %s156, %s157
    %p168 = scmp.eq.s32.totalorder %s17, 0
    %p169 = por %p167, %p168
    %p170 = scmp.ne.s32.totalorder %s156, %s157
    %p171 = scmp.eq.s32.totalorder %s18, 1
    %p172 = por %p170, %p171
    %p174 = scmp.ne.s32.totalorder %s157, %s173
    %p175 = scmp.eq.s32.totalorder %s18, 0
    %p176 = por %p174, %p175
    %p177 = scmp.le.s32.totalorder 1, %s12
    %p178 = scmp.lt.s32.totalorder %s12, 3
    %p179 = pnand %p177, %p178
    %p180 = pneg %p179
    // Predicated region
    $region9: #{_lambda_.5} parent=5 // pred_check
      _
    $region10: #{_lambda_.5} parent=5 // pred_check_branch
      %182 = sbr.rel (%p179) target = $region12
    $region11: #{_lambda_.5} parent=5 // pred_region
      %s183 = ssub.s32 %s12, 1
      // Predicated region
      $region13: #{_lambda_.5} parent=11 // pred_check
        %p184 = pneg %p59
      $region14: #{_lambda_.5} parent=11 // pred_check_branch
        %186 = sbr.rel (%p184) target = $region16
      $region15: #{_lambda_.5} parent=11 // pred_region
        _
      $region16: #{_lambda_.5} parent=11 // pred_fallthru
        _
      // Predicated region
      $region17: #{_lambda_.5} parent=11 // pred_check
        %p187 = pneg %p80
      $region18: #{_lambda_.5} parent=11 // pred_check_branch
        %189 = sbr.rel (%p187) target = $region20
      $region19: #{_lambda_.5} parent=11 // pred_region
        _
      $region20: #{_lambda_.5} parent=11 // pred_fallthru
        _
      // Predicated region
      $region21: #{_lambda_.5} parent=11 // pred_check
        %p190 = pneg %p101
      $region22: #{_lambda_.5} parent=11 // pred_check_branch
        %192 = sbr.rel (%p190) target = $region24
      $region23: #{_lambda_.5} parent=11 // pred_region
        _
      $region24: #{_lambda_.5} parent=11 // pred_fallthru
        _
      // Predicated region
      $region25: #{_lambda_.5} parent=11 // pred_check
        %p193 = pneg %p122
      $region26: #{_lambda_.5} parent=11 // pred_check_branch
        %195 = sbr.rel (%p193) target = $region28
      $region27: #{_lambda_.5} parent=11 // pred_region
        _
      $region28: #{_lambda_.5} parent=11 // pred_fallthru
        _
      // Predicated region
      $region29: #{_lambda_.5} parent=11 // pred_check
        %p196 = pneg %p143
      $region30: #{_lambda_.5} parent=11 // pred_check_branch
        %198 = sbr.rel (%p196) target = $region32
      $region31: #{_lambda_.5} parent=11 // pred_region
        _
      $region32: #{_lambda_.5} parent=11 // pred_fallthru
        _
    $region12: #{_lambda_.5} parent=5 // pred_fallthru
      _
    %p199 = scmp.lt.s32.totalorder %s12, 2
    // Predicated region
    $region33: #{_lambda_.5} parent=5 // pred_check
      %p200 = pneg %p199
    $region34: #{_lambda_.5} parent=5 // pred_check_branch
      %202 = sbr.rel (%p200) target = $region36
    $region35: #{_lambda_.5} parent=5 // pred_region
      // Predicated region
      $region37: #{_lambda_.5} parent=35 // pred_check
        %p203 = pneg %p32
      $region38: #{_lambda_.5} parent=35 // pred_check_branch
        %205 = sbr.rel (%p203) target = $region40
      $region39: #{_lambda_.5} parent=35 // pred_region
        %p206 = scmp.lt.s32.totalorder %s12, 1
        %s207 = scalar_select %p206, %s12, 1
        %s208 = smul.addr %s207, 2
        %s209 = smul.addr %s208, 4
        %s210 = scalar_lea.vmem %s0, %s209
      $region40: #{_lambda_.5} parent=35 // pred_fallthru
        _
    $region36: #{_lambda_.5} parent=5 // pred_fallthru
      _
    %p211 = scmp.le.s32.totalorder 1, %s12
    %p212 = scmp.lt.s32.totalorder %s12, 3
    %p213 = pnand %p211, %p212
    %p214 = pneg %p213
    // Predicated region
    $region41: #{_lambda_.5} parent=5 // pred_check
      _
    $region42: #{_lambda_.5} parent=5 // pred_check_branch
      %216 = sbr.rel (%p213) target = $region44
    $region43: #{_lambda_.5} parent=5 // pred_region
      %s217 = ssub.s32 %s12, 1
      %p218 = scmp.lt.s32.totalorder %s17, 1
      %s219 = scalar_select %p218, %s17, 1
      %s220 = smul.addr %s219, 2
      %s221 = smul.addr %s220, 4
      %s222 = scalar_lea.vmem %s0, %s221
      %p223 = pneg %p38
      %p224 = pneg %p35
      %p225 = pneg %p59
      %p226 = pneg %p56
      %p227 = pneg %p80
      %p228 = pneg %p77
      %p229 = pneg %p101
      %p230 = pneg %p98
      %p231 = pneg %p122
      %p232 = pneg %p119
      %p233 = pneg %p143
      %p234 = pneg %p140
      %p235 = pneg %p169
      %p236 = pneg %p166
      %p237 = scmp.lt.s32.totalorder %s17, 1
      %s238 = scalar_select %p237, %s17, 1
      %s239 = smul.addr %s238, 8
      %s240 = scalar_lea.vmem %s6, %s239
      %p241 = scmp.lt.s32.totalorder %s17, 1
      %s242 = scalar_select %p241, %s17, 1
      %s243 = smul.addr %s242, 2
      %s244 = smul.addr %s243, 4
      %s245 = scalar_lea.vmem %s0, %s244
      %p246 = scmp.lt.s32.totalorder %s17, 1
      %s247 = scalar_select %p246, %s17, 1
      %s248 = smul.addr %s247, 8
      %s249 = scalar_lea.vmem %s6, %s248
      %v251 = vld [vmem:[%s4] sm:$0x1]
      %v252 = vld [vmem:[%s5] sm:$0x1]
      %v253 = vld [vmem:[%s3] sm:$0x1f]
      %v254 = vld [vmem:[%s245] sm:$0xff]
      %v256 = vcombine.high %v254, %v254
      %v258 = vpack.c.bf16 %v254, %v254
      %v259 = vpack.c.bf16 %v256, %v256
      %v260 = vld [vmem:[%s1] sm:$0xf]
      %v261 = vld [vmem:[%s1 + $0x4] sm:$0xf]
      %v262 = vld [vmem:[%s1 + $0x8] sm:$0xf]
      %v263 = vld [vmem:[%s1 + $0xc] sm:$0xf]
      %v264 = vld [vmem:[%s1 + $0x10] sm:$0xf]
      %v265 = vld [vmem:[%s1 + $0x14] sm:$0xf]
      %v266 = vld [vmem:[%s1 + $0x18] sm:$0xf]
      %v267 = vld [vmem:[%s1 + $0x1c] sm:$0xf]
      %v268 = vld [vmem:[%s1 + $0x20] sm:$0xf]
      %v269 = vld [vmem:[%s1 + $0x24] sm:$0xf]
      %v270 = vld [vmem:[%s1 + $0x28] sm:$0xf]
      %v271 = vld [vmem:[%s1 + $0x2c] sm:$0xf]
      %v272 = vld [vmem:[%s1 + $0x30] sm:$0xf]
      %v273 = vld [vmem:[%s1 + $0x34] sm:$0xf]
      %v274 = vld [vmem:[%s1 + $0x38] sm:$0xf]
      %v275 = vld [vmem:[%s1 + $0x3c] sm:$0xf]
      %v276 = vld [vmem:[%s1 + $0x40] sm:$0xf]
      %v277 = vld [vmem:[%s1 + $0x44] sm:$0xf]
      %v278 = vld [vmem:[%s1 + $0x48] sm:$0xf]
      %v279 = vld [vmem:[%s1 + $0x4c] sm:$0xf]
      %v280 = vld [vmem:[%s1 + $0x50] sm:$0xf]
      %v281 = vld [vmem:[%s1 + $0x54] sm:$0xf]
      %v282 = vld [vmem:[%s1 + $0x58] sm:$0xf]
      %v283 = vld [vmem:[%s1 + $0x5c] sm:$0xf]
      %v308 = vunpack.c.l.b16 %v260
      %v309 = vunpack.c.l.b16 %v261
      %v310 = vunpack.c.l.b16 %v262
      %v311 = vunpack.c.l.b16 %v263
      %v312 = vunpack.c.l.b16 %v264
      %v313 = vunpack.c.l.b16 %v265
      %v314 = vunpack.c.l.b16 %v266
      %v315 = vunpack.c.l.b16 %v267
      %v316 = vunpack.c.l.b16 %v268
      %v317 = vunpack.c.l.b16 %v269
      %v318 = vunpack.c.l.b16 %v270
      %v319 = vunpack.c.l.b16 %v271
      %v320 = vunpack.c.l.b16 %v272
      %v321 = vunpack.c.l.b16 %v273
      %v322 = vunpack.c.l.b16 %v274
      %v323 = vunpack.c.l.b16 %v275
      %v324 = vunpack.c.l.b16 %v276
      %v325 = vunpack.c.l.b16 %v277
      %v326 = vunpack.c.l.b16 %v278
      %v327 = vunpack.c.l.b16 %v279
      %v328 = vunpack.c.l.b16 %v280
      %v329 = vunpack.c.l.b16 %v281
      %v330 = vunpack.c.l.b16 %v282
      %v331 = vunpack.c.l.b16 %v283
      %v332 = vpack.c.b16 %v309, %v308
      %v333 = vpack.c.b16 %v311, %v310
      %v334 = vpack.c.b16 %v313, %v312
      %v335 = vpack.c.b16 %v315, %v314
      %v336 = vpack.c.b16 %v317, %v316
      %v337 = vpack.c.b16 %v319, %v318
      %v338 = vpack.c.b16 %v321, %v320
      %v339 = vpack.c.b16 %v323, %v322
      %v340 = vpack.c.b16 %v325, %v324
      %v341 = vpack.c.b16 %v327, %v326
      %v342 = vpack.c.b16 %v329, %v328
      %v343 = vpack.c.b16 %v331, %v330
      %v357 = vrot.slane %v253, 1
      %vm359 = vcmask 523264
      %v361 = vsel %vm359, %v259, 0
      %363 = vmatprep.subr.bf16.mxu0 0
      %364 = vmatpush1.bf16.msra.mxu0 %v332
      %365 = vmatprep.subr.bf16.mxu0 0
      %366 = vmatpush1.bf16.msra.mxu0 %v333
      %367 = vmatprep.subr.bf16.mxu0 0
      %368 = vmatpush1.bf16.msra.mxu0 %v334
      %369 = vmatprep.subr.bf16.mxu0 0
      %370 = vmatpush1.bf16.msra.mxu0 %v335
      %371 = vmatprep.subr.bf16.mxu0 0
      %372 = vmatpush1.bf16.msra.mxu0 %v336
      %373 = vmatprep.subr.bf16.mxu0 0
      %374 = vmatpush1.bf16.msra.mxu0 %v337
      %375 = vmatprep.subr.bf16.mxu0 0
      %376 = vmatpush1.bf16.msra.mxu0 %v338
      %377 = vmatprep.subr.bf16.mxu0 0
      %378 = vmatpush1.bf16.msra.mxu0 %v339
      %379 = vmatprep.subr.bf16.mxu0 0
      %380 = vmatpush1.bf16.msra.mxu0 %v340
      %381 = vmatprep.subr.bf16.mxu0 0
      %382 = vmatpush1.bf16.msra.mxu0 %v341
      %383 = vmatprep.subr.bf16.mxu0 0
      %384 = vmatpush1.bf16.msra.mxu0 %v342
      %385 = vmatprep.subr.bf16.mxu0 0
      %386 = vmatpush1.bf16.msra.mxu0 %v343
      %387 = vmatprep.subr.bf16.mxu0 0
      %388 = vmatpush1.bf16.msra.mxu0 0
      %389 = vmatprep.subr.bf16.mxu0 0
      %390 = vmatpush1.bf16.msra.mxu0 0
      %391 = vmatprep.subr.bf16.mxu0 0
      %392 = vmatpush1.bf16.msra.mxu0 0
      %393 = vmatprep.subr.bf16.mxu0 0
      %394 = vmatpush1.bf16.msra.mxu0 0
      %395 = vmatprep.mubr.bf16.mxu0 %v361
      %396 = vmatmul.mubr.bf16.gmra.mrb[0].mxu0 %v258
      %v397 = vpop.f32.mrb[0].mxu0
      %v398 = vadd.f32 %v357, %v397
      %v399 = vpop.f32.mrb[0].mxu0
      %v400 = vpop.f32.mrb[0].mxu0
      %v401 = vpop.f32.mrb[0].mxu0
      %402 = vdwg.mxu0
      %vm403 = vcmask 519168
      %v404 = vsel %vm403, %v398, 0.0
      %405 = vadd.xlane.f32.xlu0 %v404
      %v406 = vpop.xlane.xlu0 %405
      %v407 = vrcp.pop 64.0
      %v408 = vmul.f32 %v406, %v407
      %v409 = vsub.f32 %v398, %v408
      %v410 = vmul.f32 %v409, %v409
      %v411 = vsel %vm403, %v410, 0.0
      %412 = vadd.xlane.f32.xlu0 %v411
      %v413 = vpop.xlane.xlu0 %412
      %v414 = vmul.f32 %v413, %v407
      %v415 = vadd.f32 %v414, 1e-05
      %v416 = vrsqrt.pop %v415
      %v417 = vmul.f32 %v409, %v416
      %v419 = vlaneseq
      %v420 = vshrl.u32 %v419, 7
      %v421 = vsub.s32 0, %v420
      %v422 = vrot.slane %v251, %v421
      %v424 = vmul.f32 %v417, %v422
      %v426 = vlaneseq
      %v427 = vshrl.u32 %v426, 7
      %v428 = vsub.s32 0, %v427
      %v429 = vrot.slane %v252, %v428
      %v431 = vadd.f32 %v424, %v429
      %432 = vst.msk [vmem:[%s249 + $0x1] sm:$0xf] %vm403, %v431
      %v433 = vld [vmem:[%s2] sm:$0x1]
      %v434 = vadd.f32 %v433, %v253
      %vm435 = vcmask 516096
      %v436 = vsel %vm435, %v434, 0.0
      %437 = vadd.xlane.f32.xlu0 %v436
      %v438 = vpop.xlane.xlu0 %437
      %v439 = vmul.f32 %v438, %v407
      %v440 = vsub.f32 %v434, %v439
      %v441 = vmul.f32 %v440, %v440
      %v442 = vsel %vm435, %v441, 0.0
      %443 = vadd.xlane.f32.xlu0 %v442
      %v444 = vpop.xlane.xlu0 %443
      %v445 = vmul.f32 %v444, %v407
      %v446 = vadd.f32 %v445, 1e-05
      %v447 = vrsqrt.pop %v446
      %v448 = vmul.f32 %v440, %v447
      %v449 = vmul.f32 %v448, %v251
      %v450 = vadd.f32 %v449, %v252
      %451 = vst.msk [vmem:[%s249] sm:$0x1] %vm435, %v450
      %p452 = scmp.lt.s32.totalorder %s17, 1
      %s453 = scalar_select %p452, %s17, 1
      %s454 = smul.addr %s453, 8
      %s455 = scalar_lea.vmem %s6, %s454
      // Predicated region
      $region45: #{_lambda_.5} parent=43 // pred_check
        %p456 = pneg %p166
      $region46: #{_lambda_.5} parent=43 // pred_check_branch
        %458 = sbr.rel (%p456) target = $region48
      $region47: #{_lambda_.5} parent=43 // pred_region
        _
      $region48: #{_lambda_.5} parent=43 // pred_fallthru
        _
    $region44: #{_lambda_.5} parent=5 // pred_fallthru
      _
    %p459 = scmp.le.s32.totalorder 2, %s12
    // Predicated region
    $region49: #{_lambda_.5} parent=5 // pred_check
      %p460 = pneg %p459
    $region50: #{_lambda_.5} parent=5 // pred_check_branch
      %462 = sbr.rel (%p460) target = $region52
    $region51: #{_lambda_.5} parent=5 // pred_region
      %s463 = ssub.s32 %s12, 2
      // Predicated region
      $region53: #{_lambda_.5} parent=51 // pred_check
        %p464 = pneg %p172
      $region54: #{_lambda_.5} parent=51 // pred_check_branch
        %466 = sbr.rel (%p464) target = $region56
      $region55: #{_lambda_.5} parent=51 // pred_region
        %p467 = scmp.lt.s32.totalorder %s18, 1
        %s468 = scalar_select %p467, %s18, 1
        %s469 = smul.addr %s468, 8
        %s470 = scalar_lea.vmem %s6, %s469
      $region56: #{_lambda_.5} parent=51 // pred_fallthru
        _
    $region52: #{_lambda_.5} parent=5 // pred_fallthru
      _
  $region6: #{_lambda_.5} parent=0 // loop_footer
    %s16 = sadd.s32 1, %s12
  $region7: #{_lambda_.5} parent=0 // loop_footer_branch
    %11 = sbr.rel target = $region3
  $region8: #{_lambda_.5} parent=0 // loop_exit
    _

// kernel: _lambda_.7
$region0: #{_lambda_.7}
  #allocation0 [shape = 'u32[]', space=smem, size = 0x4, offset = 0x4, fixed_abs, tag = 'smem constant byte address 0x4 - core index']
  #allocation1 [shape = 'u32[144,128]{1,0:T(1,128)}', space=vmem, size = 0x12000, scoped, tag = 'internal scratch']
  %s0 = inlined_call_operand.vmem [shape: f32[2,5,64], index: 0, kind: input, shape index: {}]
  %s1 = inlined_call_operand.vmem [shape: f32[1,64], index: 1, kind: input, shape index: {}]
  %s2 = inlined_call_operand.vmem [shape: f32[1,64], index: 2, kind: input, shape index: {}]
  %s3 = inlined_call_operand.vmem [shape: bf16[64,128], index: 3, kind: input, shape index: {}]
  %s4 = inlined_call_operand.vmem [shape: f32[1,128], index: 4, kind: input, shape index: {}]
  %s5 = inlined_call_operand.vmem [shape: bf16[128,64], index: 5, kind: input, shape index: {}]
  %s6 = inlined_call_operand.vmem [shape: f32[1,64], index: 6, kind: input, shape index: {}]
  %s7 = inlined_call_operand.vmem [shape: f32[2,5,64], index: 7, kind: output, shape index: {}]
  %s8 = sld [smem:[#allocation0]]
  $region61: #{_lambda_.7} parent=0
    _
  %s10 = ssub.s32 1, %s8
  %s11 = scalar_select 0, %s10, %s8
  loop: start=0, step=1, limit=4
  $region2: #{_lambda_.7} parent=0 // loop_pre_header
    _
  $region3: #{_lambda_.7} parent=0 // loop_header
    %s13 = sphi 0, %s17
    %p14 = scmp.ge.s32.totalorder %s13, 4
    %s23 = sphi 0, %s25
    %s26 = sphi 0, %s23
    %s27 = sphi 0, %s26
    %s43 = sphi 0, %s27
    %s47 = sphi 0, %s47
    %s49 = sphi 0, %s47
    %s50 = sphi 0, %s49
    %s64 = sphi 0, %s50
    %s68 = sphi 0, %s68
    %s70 = sphi 0, %s68
    %s71 = sphi 0, %s70
    %s85 = sphi 0, %s71
    %s89 = sphi 0, %s89
    %s91 = sphi 0, %s89
    %s92 = sphi 0, %s91
    %s106 = sphi 0, %s92
    %s110 = sphi 0, %s110
    %s112 = sphi 0, %s110
    %s113 = sphi 0, %s112
    %s127 = sphi 0, %s113
    %s131 = sphi 0, %s131
    %s133 = sphi 0, %s131
    %s134 = sphi 0, %s133
    %s148 = sphi 0, %s134
    %s152 = sphi 0, %s152
    %s154 = sphi 0, %s152
    %s155 = sphi 0, %s154
    %s169 = sphi 0, %s155
    %s175 = sphi 0, %s177
    %s178 = sphi 0, %s175
    %s179 = sphi 0, %s178
    %s195 = sphi 0, %s179
  $region4: #{_lambda_.7} parent=0 // loop_header_branch
    %16 = sbr.rel (%p14) target = $region8
  $region5: #{_lambda_.7} parent=0 // loop_body
    %s18 = ssub.s32 %s13, 1
    %s19 = ssub.s32 %s13, 2
    %s20 = sadd.s32 %s13, 1
    %s21 = ssub.s32 %s13, %s20
    %p22 = scmp.eq.s32.totalorder %s21, 0
    %s24 = sadd.s32 %s23, 1
    %s25 = scalar_select %p22, %s23, %s24
    %p28 = pneg %p22
    %p29 = scmp.eq.s32.totalorder %s13, 1
    %p30 = por %p28, %p29
    %p31 = scmp.ne.s32.totalorder %s23, %s26
    %p32 = scmp.eq.s32.totalorder %s13, 0
    %p33 = por %p31, %p32
    %p34 = scmp.ne.s32.totalorder %s23, %s26
    %p35 = scmp.eq.s32.totalorder %s18, 1
    %p36 = por %p34, %p35
    %p37 = scmp.ne.s32.totalorder %s26, %s27
    %p38 = scmp.eq.s32.totalorder %s18, 0
    %p39 = por %p37, %p38
    %p40 = scmp.ne.s32.totalorder %s26, %s27
    %p41 = scmp.eq.s32.totalorder %s19, 1
    %p42 = por %p40, %p41
    %p44 = scmp.ne.s32.totalorder %s27, %s43
    %p45 = scmp.eq.s32.totalorder %s19, 0
    %p46 = por %p44, %p45
    %s48 = sadd.s32 %s47, 1
    %p51 = scmp.eq.s32.totalorder %s13, 1
    %p52 = scmp.ne.s32.totalorder %s47, %s49
    %p53 = scmp.eq.s32.totalorder %s13, 0
    %p54 = por %p52, %p53
    %p55 = scmp.ne.s32.totalorder %s47, %s49
    %p56 = scmp.eq.s32.totalorder %s18, 1
    %p57 = por %p55, %p56
    %p58 = scmp.ne.s32.totalorder %s49, %s50
    %p59 = scmp.eq.s32.totalorder %s18, 0
    %p60 = por %p58, %p59
    %p61 = scmp.ne.s32.totalorder %s49, %s50
    %p62 = scmp.eq.s32.totalorder %s19, 1
    %p63 = por %p61, %p62
    %p65 = scmp.ne.s32.totalorder %s50, %s64
    %p66 = scmp.eq.s32.totalorder %s19, 0
    %p67 = por %p65, %p66
    %s69 = sadd.s32 %s68, 1
    %p72 = scmp.eq.s32.totalorder %s13, 1
    %p73 = scmp.ne.s32.totalorder %s68, %s70
    %p74 = scmp.eq.s32.totalorder %s13, 0
    %p75 = por %p73, %p74
    %p76 = scmp.ne.s32.totalorder %s68, %s70
    %p77 = scmp.eq.s32.totalorder %s18, 1
    %p78 = por %p76, %p77
    %p79 = scmp.ne.s32.totalorder %s70, %s71
    %p80 = scmp.eq.s32.totalorder %s18, 0
    %p81 = por %p79, %p80
    %p82 = scmp.ne.s32.totalorder %s70, %s71
    %p83 = scmp.eq.s32.totalorder %s19, 1
    %p84 = por %p82, %p83
    %p86 = scmp.ne.s32.totalorder %s71, %s85
    %p87 = scmp.eq.s32.totalorder %s19, 0
    %p88 = por %p86, %p87
    %s90 = sadd.s32 %s89, 1
    %p93 = scmp.eq.s32.totalorder %s13, 1
    %p94 = scmp.ne.s32.totalorder %s89, %s91
    %p95 = scmp.eq.s32.totalorder %s13, 0
    %p96 = por %p94, %p95
    %p97 = scmp.ne.s32.totalorder %s89, %s91
    %p98 = scmp.eq.s32.totalorder %s18, 1
    %p99 = por %p97, %p98
    %p100 = scmp.ne.s32.totalorder %s91, %s92
    %p101 = scmp.eq.s32.totalorder %s18, 0
    %p102 = por %p100, %p101
    %p103 = scmp.ne.s32.totalorder %s91, %s92
    %p104 = scmp.eq.s32.totalorder %s19, 1
    %p105 = por %p103, %p104
    %p107 = scmp.ne.s32.totalorder %s92, %s106
    %p108 = scmp.eq.s32.totalorder %s19, 0
    %p109 = por %p107, %p108
    %s111 = sadd.s32 %s110, 1
    %p114 = scmp.eq.s32.totalorder %s13, 1
    %p115 = scmp.ne.s32.totalorder %s110, %s112
    %p116 = scmp.eq.s32.totalorder %s13, 0
    %p117 = por %p115, %p116
    %p118 = scmp.ne.s32.totalorder %s110, %s112
    %p119 = scmp.eq.s32.totalorder %s18, 1
    %p120 = por %p118, %p119
    %p121 = scmp.ne.s32.totalorder %s112, %s113
    %p122 = scmp.eq.s32.totalorder %s18, 0
    %p123 = por %p121, %p122
    %p124 = scmp.ne.s32.totalorder %s112, %s113
    %p125 = scmp.eq.s32.totalorder %s19, 1
    %p126 = por %p124, %p125
    %p128 = scmp.ne.s32.totalorder %s113, %s127
    %p129 = scmp.eq.s32.totalorder %s19, 0
    %p130 = por %p128, %p129
    %s132 = sadd.s32 %s131, 1
    %p135 = scmp.eq.s32.totalorder %s13, 1
    %p136 = scmp.ne.s32.totalorder %s131, %s133
    %p137 = scmp.eq.s32.totalorder %s13, 0
    %p138 = por %p136, %p137
    %p139 = scmp.ne.s32.totalorder %s131, %s133
    %p140 = scmp.eq.s32.totalorder %s18, 1
    %p141 = por %p139, %p140
    %p142 = scmp.ne.s32.totalorder %s133, %s134
    %p143 = scmp.eq.s32.totalorder %s18, 0
    %p144 = por %p142, %p143
    %p145 = scmp.ne.s32.totalorder %s133, %s134
    %p146 = scmp.eq.s32.totalorder %s19, 1
    %p147 = por %p145, %p146
    %p149 = scmp.ne.s32.totalorder %s134, %s148
    %p150 = scmp.eq.s32.totalorder %s19, 0
    %p151 = por %p149, %p150
    %s153 = sadd.s32 %s152, 1
    %p156 = scmp.eq.s32.totalorder %s13, 1
    %p157 = scmp.ne.s32.totalorder %s152, %s154
    %p158 = scmp.eq.s32.totalorder %s13, 0
    %p159 = por %p157, %p158
    %p160 = scmp.ne.s32.totalorder %s152, %s154
    %p161 = scmp.eq.s32.totalorder %s18, 1
    %p162 = por %p160, %p161
    %p163 = scmp.ne.s32.totalorder %s154, %s155
    %p164 = scmp.eq.s32.totalorder %s18, 0
    %p165 = por %p163, %p164
    %p166 = scmp.ne.s32.totalorder %s154, %s155
    %p167 = scmp.eq.s32.totalorder %s19, 1
    %p168 = por %p166, %p167
    %p170 = scmp.ne.s32.totalorder %s155, %s169
    %p171 = scmp.eq.s32.totalorder %s19, 0
    %p172 = por %p170, %p171
    %s173 = ssub.s32 %s13, %s20
    %p174 = scmp.eq.s32.totalorder %s173, 0
    %s176 = sadd.s32 %s175, 1
    %s177 = scalar_select %p174, %s175, %s176
    %p180 = pneg %p174
    %p181 = scmp.eq.s32.totalorder %s13, 1
    %p182 = por %p180, %p181
    %p183 = scmp.ne.s32.totalorder %s175, %s178
    %p184 = scmp.eq.s32.totalorder %s13, 0
    %p185 = por %p183, %p184
    %p186 = scmp.ne.s32.totalorder %s175, %s178
    %p187 = scmp.eq.s32.totalorder %s18, 1
    %p188 = por %p186, %p187
    %p189 = scmp.ne.s32.totalorder %s178, %s179
    %p190 = scmp.eq.s32.totalorder %s18, 0
    %p191 = por %p189, %p190
    %p192 = scmp.ne.s32.totalorder %s178, %s179
    %p193 = scmp.eq.s32.totalorder %s19, 1
    %p194 = por %p192, %p193
    %p196 = scmp.ne.s32.totalorder %s179, %s195
    %p197 = scmp.eq.s32.totalorder %s19, 0
    %p198 = por %p196, %p197
    %p199 = scmp.le.s32.totalorder 1, %s13
    %p200 = scmp.lt.s32.totalorder %s13, 3
    %p201 = pnand %p199, %p200
    %p202 = pneg %p201
    // Predicated region
    $region9: #{_lambda_.7} parent=5 // pred_check
      _
    $region10: #{_lambda_.7} parent=5 // pred_check_branch
      %204 = sbr.rel (%p201) target = $region12
    $region11: #{_lambda_.7} parent=5 // pred_region
      %s205 = ssub.s32 %s13, 1
      // Predicated region
      $region13: #{_lambda_.7} parent=11 // pred_check
        %p206 = pneg %p60
      $region14: #{_lambda_.7} parent=11 // pred_check_branch
        %208 = sbr.rel (%p206) target = $region16
      $region15: #{_lambda_.7} parent=11 // pred_region
        _
      $region16: #{_lambda_.7} parent=11 // pred_fallthru
        _
      // Predicated region
      $region17: #{_lambda_.7} parent=11 // pred_check
        %p209 = pneg %p81
      $region18: #{_lambda_.7} parent=11 // pred_check_branch
        %211 = sbr.rel (%p209) target = $region20
      $region19: #{_lambda_.7} parent=11 // pred_region
        _
      $region20: #{_lambda_.7} parent=11 // pred_fallthru
        _
      // Predicated region
      $region21: #{_lambda_.7} parent=11 // pred_check
        %p212 = pneg %p102
      $region22: #{_lambda_.7} parent=11 // pred_check_branch
        %214 = sbr.rel (%p212) target = $region24
      $region23: #{_lambda_.7} parent=11 // pred_region
        _
      $region24: #{_lambda_.7} parent=11 // pred_fallthru
        _
      // Predicated region
      $region25: #{_lambda_.7} parent=11 // pred_check
        %p215 = pneg %p123
      $region26: #{_lambda_.7} parent=11 // pred_check_branch
        %217 = sbr.rel (%p215) target = $region28
      $region27: #{_lambda_.7} parent=11 // pred_region
        _
      $region28: #{_lambda_.7} parent=11 // pred_fallthru
        _
      // Predicated region
      $region29: #{_lambda_.7} parent=11 // pred_check
        %p218 = pneg %p144
      $region30: #{_lambda_.7} parent=11 // pred_check_branch
        %220 = sbr.rel (%p218) target = $region32
      $region31: #{_lambda_.7} parent=11 // pred_region
        _
      $region32: #{_lambda_.7} parent=11 // pred_fallthru
        _
      // Predicated region
      $region33: #{_lambda_.7} parent=11 // pred_check
        %p221 = pneg %p165
      $region34: #{_lambda_.7} parent=11 // pred_check_branch
        %223 = sbr.rel (%p221) target = $region36
      $region35: #{_lambda_.7} parent=11 // pred_region
        _
      $region36: #{_lambda_.7} parent=11 // pred_fallthru
        _
    $region12: #{_lambda_.7} parent=5 // pred_fallthru
      _
    %p224 = scmp.lt.s32.totalorder %s13, 2
    // Predicated region
    $region37: #{_lambda_.7} parent=5 // pred_check
      %p225 = pneg %p224
    $region38: #{_lambda_.7} parent=5 // pred_check_branch
      %227 = sbr.rel (%p225) target = $region40
    $region39: #{_lambda_.7} parent=5 // pred_region
      // Predicated region
      $region41: #{_lambda_.7} parent=39 // pred_check
        %p228 = pneg %p33
      $region42: #{_lambda_.7} parent=39 // pred_check_branch
        %230 = sbr.rel (%p228) target = $region44
      $region43: #{_lambda_.7} parent=39 // pred_region
        %p231 = scmp.lt.s32.totalorder %s13, 1
        %s232 = scalar_select %p231, %s13, 1
        %s233 = smul.addr %s232, 8
        %s234 = scalar_lea.vmem %s0, %s233
      $region44: #{_lambda_.7} parent=39 // pred_fallthru
        _
    $region40: #{_lambda_.7} parent=5 // pred_fallthru
      _
    %p235 = scmp.le.s32.totalorder 1, %s13
    %p236 = scmp.lt.s32.totalorder %s13, 3
    %p237 = pnand %p235, %p236
    %p238 = pneg %p237
    // Predicated region
    $region45: #{_lambda_.7} parent=5 // pred_check
      _
    $region46: #{_lambda_.7} parent=5 // pred_check_branch
      %240 = sbr.rel (%p237) target = $region48
    $region47: #{_lambda_.7} parent=5 // pred_region
      %s241 = ssub.s32 %s13, 1
      %p242 = scmp.lt.s32.totalorder %s18, 1
      %s243 = scalar_select %p242, %s18, 1
      %s244 = smul.addr %s243, 8
      %s245 = scalar_lea.vmem %s0, %s244
      %p246 = pneg %p39
      %p247 = pneg %p36
      %p248 = pneg %p60
      %p249 = pneg %p57
      %p250 = pneg %p81
      %p251 = pneg %p78
      %p252 = pneg %p102
      %p253 = pneg %p99
      %p254 = pneg %p123
      %p255 = pneg %p120
      %p256 = pneg %p144
      %p257 = pneg %p141
      %p258 = pneg %p165
      %p259 = pneg %p162
      %p260 = pneg %p191
      %p261 = pneg %p188
      %p262 = scmp.lt.s32.totalorder %s18, 1
      %s263 = scalar_select %p262, %s18, 1
      %s264 = smul.addr %s263, 8
      %s265 = scalar_lea.vmem %s7, %s264
      %p266 = scmp.lt.s32.totalorder %s18, 1
      %s267 = scalar_select %p266, %s18, 1
      %s268 = smul.addr %s267, 8
      %s269 = scalar_lea.vmem %s0, %s268
      %p270 = scmp.lt.s32.totalorder %s18, 1
      %s271 = scalar_select %p270, %s18, 1
      %s272 = smul.addr %s271, 8
      %s273 = scalar_lea.vmem %s7, %s272
      %v275 = vld [vmem:[%s269] sm:$0x1f]
      %v276 = vld [vmem:[%s1] sm:$0x1]
      %v277 = vld [vmem:[%s2] sm:$0x1]
      %vm278 = vcmask 520192
      %v279 = vsel %vm278, %v275, 0.0
      %280 = vadd.xlane.f32.xlu0 %v279
      %v281 = vpop.xlane.xlu0 %280
      %v282 = vrcp.pop 64.0
      %v283 = vmul.f32 %v281, %v282
      %v284 = vsub.f32 %v275, %v283
      %v285 = vmul.f32 %v284, %v284
      %v286 = vsel %vm278, %v285, 0.0
      %287 = vadd.xlane.f32.xlu0 %v286
      %v288 = vpop.xlane.xlu0 %287
      %v289 = vmul.f32 %v288, %v282
      %v290 = vadd.f32 %v289, 1e-05
      %v291 = vrsqrt.pop %v290
      %v292 = vmul.f32 %v284, %v291
      %v294 = vlaneseq
      %v295 = vshrl.u32 %v294, 7
      %v296 = vsub.s32 0, %v295
      %v297 = vrot.slane %v276, %v296
      %v299 = vmul.f32 %v292, %v297
      %v301 = vlaneseq
      %v302 = vshrl.u32 %v301, 7
      %v303 = vsub.s32 0, %v302
      %v304 = vrot.slane %v277, %v303
      %v306 = vadd.f32 %v299, %v304
      %v307 = vpack.c.bf16 %v306, %v306
      %v308 = vld [vmem:[%s3] sm:$0xf]
      %v309 = vld [vmem:[%s3 + $0x4] sm:$0xf]
      %v310 = vld [vmem:[%s3 + $0x8] sm:$0xf]
      %v311 = vld [vmem:[%s3 + $0xc] sm:$0xf]
      %v312 = vld [vmem:[%s3 + $0x10] sm:$0xf]
      %v313 = vld [vmem:[%s3 + $0x14] sm:$0xf]
      %v314 = vld [vmem:[%s3 + $0x18] sm:$0xf]
      %v315 = vld [vmem:[%s3 + $0x1c] sm:$0xf]
      %v316 = vld [vmem:[%s4] sm:$0x1]
      %v318 = vlaneseq
      %v319 = vshrl.u32 %v318, 7
      %v320 = vsub.s32 0, %v319
      %v321 = vrot.slane %v316, %v320
      %v331 = vunpack.c.l.b16 %v308
      %v332 = vunpack.c.l.b16 %v309
      %v333 = vunpack.c.l.b16 %v310
      %v334 = vunpack.c.l.b16 %v311
      %v335 = vunpack.c.l.b16 %v312
      %v336 = vunpack.c.l.b16 %v313
      %v337 = vunpack.c.l.b16 %v314
      %v338 = vunpack.c.l.b16 %v315
      %v339 = vpack.c.b16 %v332, %v331
      %v340 = vpack.c.b16 %v334, %v333
      %v341 = vpack.c.b16 %v336, %v335
      %v342 = vpack.c.b16 %v338, %v337
      %vm347 = vcmask 523264
      %v349 = vsel %vm347, %v307, 0
      %351 = vmatprep.subr.bf16.mxu0 0
      %352 = vmatpush1.bf16.msra.mxu0 %v339
      %353 = vmatprep.subr.bf16.mxu0 0
      %354 = vmatpush1.bf16.msra.mxu0 %v340
      %355 = vmatprep.subr.bf16.mxu0 0
      %356 = vmatpush1.bf16.msra.mxu0 %v341
      %357 = vmatprep.subr.bf16.mxu0 0
      %358 = vmatpush1.bf16.msra.mxu0 %v342
      %359 = vmatprep.subr.bf16.mxu0 0
      %360 = vmatpush1.bf16.msra.mxu0 0
      %361 = vmatprep.subr.bf16.mxu0 0
      %362 = vmatpush1.bf16.msra.mxu0 0
      %363 = vmatprep.subr.bf16.mxu0 0
      %364 = vmatpush1.bf16.msra.mxu0 0
      %365 = vmatprep.subr.bf16.mxu0 0
      %366 = vmatpush1.bf16.msra.mxu0 0
      %367 = vmatprep.subr.bf16.mxu0 0
      %368 = vmatpush1.bf16.msra.mxu0 0
      %369 = vmatprep.subr.bf16.mxu0 0
      %370 = vmatpush1.bf16.msra.mxu0 0
      %371 = vmatprep.subr.bf16.mxu0 0
      %372 = vmatpush1.bf16.msra.mxu0 0
      %373 = vmatprep.subr.bf16.mxu0 0
      %374 = vmatpush1.bf16.msra.mxu0 0
      %375 = vmatprep.subr.bf16.mxu0 0
      %376 = vmatpush1.bf16.msra.mxu0 0
      %377 = vmatprep.subr.bf16.mxu0 0
      %378 = vmatpush1.bf16.msra.mxu0 0
      %379 = vmatprep.subr.bf16.mxu0 0
      %380 = vmatpush1.bf16.msra.mxu0 0
      %381 = vmatprep.subr.bf16.mxu0 0
      %382 = vmatpush1.bf16.msra.mxu0 0
      %383 = vmatprep.mubr.bf16.mxu0 0
      %384 = vmatmul.mubr.bf16.gmra.mrb[0].mxu0 %v349
      %v385 = vpop.f32.mrb[0].mxu0
      %v386 = vadd.f32 %v321, %v385
      %v387 = vpop.f32.mrb[0].mxu0
      %v388 = vpop.f32.mrb[0].mxu0
      %v389 = vpop.f32.mrb[0].mxu0
      %390 = vdwg.mxu0
      %v391 = vmul.f32 %v386, 1.702
      %v392 = vxor.u32 %v391, 2147483648
      %v393 = vmul.f32 %v392, 1.442695
      %v394 = vpow.pop %v393
      %v395 = vadd.f32 %v394, 1.0
      %v396 = vrcp.pop %v395
      %v397 = vmul.f32 1.0, %v396
      %v398 = vmul.f32 %v386, %v397
      %v399 = vpack.c.bf16 %v398, %v398
      %v400 = vld [vmem:[%s5] sm:$0xf]
      %v401 = vld [vmem:[%s5 + $0x4] sm:$0xf]
      %v402 = vld [vmem:[%s5 + $0x8] sm:$0xf]
      %v403 = vld [vmem:[%s5 + $0xc] sm:$0xf]
      %v404 = vld [vmem:[%s5 + $0x10] sm:$0xf]
      %v405 = vld [vmem:[%s5 + $0x14] sm:$0xf]
      %v406 = vld [vmem:[%s5 + $0x18] sm:$0xf]
      %v407 = vld [vmem:[%s5 + $0x1c] sm:$0xf]
      %v408 = vld [vmem:[%s5 + $0x20] sm:$0xf]
      %v409 = vld [vmem:[%s5 + $0x24] sm:$0xf]
      %v410 = vld [vmem:[%s5 + $0x28] sm:$0xf]
      %v411 = vld [vmem:[%s5 + $0x2c] sm:$0xf]
      %v412 = vld [vmem:[%s5 + $0x30] sm:$0xf]
      %v413 = vld [vmem:[%s5 + $0x34] sm:$0xf]
      %v414 = vld [vmem:[%s5 + $0x38] sm:$0xf]
      %v415 = vld [vmem:[%s5 + $0x3c] sm:$0xf]
      %v416 = vld [vmem:[%s6] sm:$0x1]
      %v418 = vlaneseq
      %v419 = vshrl.u32 %v418, 7
      %v420 = vsub.s32 0, %v419
      %v421 = vrot.slane %v416, %v420
      %v439 = vunpack.c.l.b16 %v400
      %v440 = vunpack.c.l.b16 %v401
      %v441 = vunpack.c.l.b16 %v402
      %v442 = vunpack.c.l.b16 %v403
      %v443 = vunpack.c.l.b16 %v404
      %v444 = vunpack.c.l.b16 %v405
      %v445 = vunpack.c.l.b16 %v406
      %v446 = vunpack.c.l.b16 %v407
      %v447 = vunpack.c.l.b16 %v408
      %v448 = vunpack.c.l.b16 %v409
      %v449 = vunpack.c.l.b16 %v410
      %v450 = vunpack.c.l.b16 %v411
      %v451 = vunpack.c.l.b16 %v412
      %v452 = vunpack.c.l.b16 %v413
      %v453 = vunpack.c.l.b16 %v414
      %v454 = vunpack.c.l.b16 %v415
      %v455 = vpack.c.b16 %v440, %v439
      %v456 = vpack.c.b16 %v442, %v441
      %v457 = vpack.c.b16 %v444, %v443
      %v458 = vpack.c.b16 %v446, %v445
      %v459 = vpack.c.b16 %v448, %v447
      %v460 = vpack.c.b16 %v450, %v449
      %v461 = vpack.c.b16 %v452, %v451
      %v462 = vpack.c.b16 %v454, %v453
      %471 = vmatprep.subr.bf16.mxu0 0
      %472 = vmatpush1.bf16.msra.mxu0 %v455
      %473 = vmatprep.subr.bf16.mxu0 0
      %474 = vmatpush1.bf16.msra.mxu0 %v456
      %475 = vmatprep.subr.bf16.mxu0 0
      %476 = vmatpush1.bf16.msra.mxu0 %v457
      %477 = vmatprep.subr.bf16.mxu0 0
      %478 = vmatpush1.bf16.msra.mxu0 %v458
      %479 = vmatprep.subr.bf16.mxu0 0
      %480 = vmatpush1.bf16.msra.mxu0 %v459
      %481 = vmatprep.subr.bf16.mxu0 0
      %482 = vmatpush1.bf16.msra.mxu0 %v460
      %483 = vmatprep.subr.bf16.mxu0 0
      %484 = vmatpush1.bf16.msra.mxu0 %v461
      %485 = vmatprep.subr.bf16.mxu0 0
      %486 = vmatpush1.bf16.msra.mxu0 %v462
      %487 = vmatprep.subr.bf16.mxu0 0
      %488 = vmatpush1.bf16.msra.mxu0 0
      %489 = vmatprep.subr.bf16.mxu0 0
      %490 = vmatpush1.bf16.msra.mxu0 0
      %491 = vmatprep.subr.bf16.mxu0 0
      %492 = vmatpush1.bf16.msra.mxu0 0
      %493 = vmatprep.subr.bf16.mxu0 0
      %494 = vmatpush1.bf16.msra.mxu0 0
      %495 = vmatprep.subr.bf16.mxu0 0
      %496 = vmatpush1.bf16.msra.mxu0 0
      %497 = vmatprep.subr.bf16.mxu0 0
      %498 = vmatpush1.bf16.msra.mxu0 0
      %499 = vmatprep.subr.bf16.mxu0 0
      %500 = vmatpush1.bf16.msra.mxu0 0
      %501 = vmatprep.subr.bf16.mxu0 0
      %502 = vmatpush1.bf16.msra.mxu0 0
      %503 = vmatprep.mubr.bf16.mxu0 0
      %504 = vmatmul.mubr.bf16.gmra.mrb[0].mxu0 %v399
      %v505 = vpop.f32.mrb[0].mxu0
      %v506 = vadd.f32 %v421, %v505
      %v507 = vpop.f32.mrb[0].mxu0
      %v508 = vpop.f32.mrb[0].mxu0
      %v509 = vpop.f32.mrb[0].mxu0
      %510 = vdwg.mxu0
      %v511 = vadd.f32 %v275, %v506
      %512 = vst.msk [vmem:[%s273] sm:$0x1f] %vm278, %v511
      %p513 = scmp.lt.s32.totalorder %s18, 1
      %s514 = scalar_select %p513, %s18, 1
      %s515 = smul.addr %s514, 8
      %s516 = scalar_lea.vmem %s7, %s515
      // Predicated region
      $region49: #{_lambda_.7} parent=47 // pred_check
        %p517 = pneg %p188
      $region50: #{_lambda_.7} parent=47 // pred_check_branch
        %519 = sbr.rel (%p517) target = $region52
      $region51: #{_lambda_.7} parent=47 // pred_region
        _
      $region52: #{_lambda_.7} parent=47 // pred_fallthru
        _
    $region48: #{_lambda_.7} parent=5 // pred_fallthru
      _
    %p520 = scmp.le.s32.totalorder 2, %s13
    // Predicated region
    $region53: #{_lambda_.7} parent=5 // pred_check
      %p521 = pneg %p520
    $region54: #{_lambda_.7} parent=5 // pred_check_branch
      %523 = sbr.rel (%p521) target = $region56
    $region55: #{_lambda_.7} parent=5 // pred_region
      %s524 = ssub.s32 %s13, 2
      // Predicated region
      $region57: #{_lambda_.7} parent=55 // pred_check
        %p525 = pneg %p194
      $region58: #{_lambda_.7} parent=55 // pred_check_branch
        %527 = sbr.rel (%p525) target = $region60
      $region59: #{_lambda_.7} parent=55 // pred_region
        %p528 = scmp.lt.s32.totalorder %s19, 1
        %s529 = scalar_select %p528, %s19, 1
        %s530 = smul.addr %s529, 8
        %s531 = scalar_lea.vmem %s7, %s530
      $region60: #{_lambda_.7} parent=55 // pred_fallthru
        _
    $region56: #{_lambda_.7} parent=5 // pred_fallthru
      _
  $region6: #{_lambda_.7} parent=0 // loop_footer
    %s17 = sadd.s32 1, %s13
  $region7: #{_lambda_.7} parent=0 // loop_footer_branch
    %12 = sbr.rel target = $region3
  $region8: #{_lambda_.7} parent=0 // loop_exit
    _

// kernel: _lambda_.6
$region0: #{_lambda_.6}
  #allocation0 [shape = 'u32[]', space=smem, size = 0x4, offset = 0x4, fixed_abs, tag = 'smem constant byte address 0x4 - core index']
  #allocation1 [shape = 'u32[144,128]{1,0:T(1,128)}', space=vmem, size = 0x12000, scoped, tag = 'internal scratch']
  %s0 = inlined_call_operand.vmem [shape: f32[2,5,64], index: 0, kind: input, shape index: {}]
  %s1 = inlined_call_operand.vmem [shape: f32[1,64], index: 1, kind: input, shape index: {}]
  %s2 = inlined_call_operand.vmem [shape: f32[1,64], index: 2, kind: input, shape index: {}]
  %s3 = inlined_call_operand.vmem [shape: bf16[64,192], index: 3, kind: input, shape index: {}]
  %s4 = inlined_call_operand.vmem [shape: f32[1,192], index: 4, kind: input, shape index: {}]
  %s5 = inlined_call_operand.vmem [shape: bf16[64,64], index: 5, kind: input, shape index: {}]
  %s6 = inlined_call_operand.vmem [shape: f32[1,64], index: 6, kind: input, shape index: {}]
  %s7 = inlined_call_operand.vmem [shape: f32[2,5,64], index: 7, kind: output, shape index: {}]
  %s8 = sld [smem:[#allocation0]]
  $region61: #{_lambda_.6} parent=0
    _
  %s10 = ssub.s32 1, %s8
  %s11 = scalar_select 0, %s10, %s8
  loop: start=0, step=1, limit=4
  $region2: #{_lambda_.6} parent=0 // loop_pre_header
    _
  $region3: #{_lambda_.6} parent=0 // loop_header
    %s13 = sphi 0, %s17
    %p14 = scmp.ge.s32.totalorder %s13, 4
    %s23 = sphi 0, %s25
    %s26 = sphi 0, %s23
    %s27 = sphi 0, %s26
    %s43 = sphi 0, %s27
    %s47 = sphi 0, %s47
    %s49 = sphi 0, %s47
    %s50 = sphi 0, %s49
    %s64 = sphi 0, %s50
    %s68 = sphi 0, %s68
    %s70 = sphi 0, %s68
    %s71 = sphi 0, %s70
    %s85 = sphi 0, %s71
    %s89 = sphi 0, %s89
    %s91 = sphi 0, %s89
    %s92 = sphi 0, %s91
    %s106 = sphi 0, %s92
    %s110 = sphi 0, %s110
    %s112 = sphi 0, %s110
    %s113 = sphi 0, %s112
    %s127 = sphi 0, %s113
    %s131 = sphi 0, %s131
    %s133 = sphi 0, %s131
    %s134 = sphi 0, %s133
    %s148 = sphi 0, %s134
    %s152 = sphi 0, %s152
    %s154 = sphi 0, %s152
    %s155 = sphi 0, %s154
    %s169 = sphi 0, %s155
    %s175 = sphi 0, %s177
    %s178 = sphi 0, %s175
    %s179 = sphi 0, %s178
    %s195 = sphi 0, %s179
  $region4: #{_lambda_.6} parent=0 // loop_header_branch
    %16 = sbr.rel (%p14) target = $region8
  $region5: #{_lambda_.6} parent=0 // loop_body
    %s18 = ssub.s32 %s13, 1
    %s19 = ssub.s32 %s13, 2
    %s20 = sadd.s32 %s13, 1
    %s21 = ssub.s32 %s13, %s20
    %p22 = scmp.eq.s32.totalorder %s21, 0
    %s24 = sadd.s32 %s23, 1
    %s25 = scalar_select %p22, %s23, %s24
    %p28 = pneg %p22
    %p29 = scmp.eq.s32.totalorder %s13, 1
    %p30 = por %p28, %p29
    %p31 = scmp.ne.s32.totalorder %s23, %s26
    %p32 = scmp.eq.s32.totalorder %s13, 0
    %p33 = por %p31, %p32
    %p34 = scmp.ne.s32.totalorder %s23, %s26
    %p35 = scmp.eq.s32.totalorder %s18, 1
    %p36 = por %p34, %p35
    %p37 = scmp.ne.s32.totalorder %s26, %s27
    %p38 = scmp.eq.s32.totalorder %s18, 0
    %p39 = por %p37, %p38
    %p40 = scmp.ne.s32.totalorder %s26, %s27
    %p41 = scmp.eq.s32.totalorder %s19, 1
    %p42 = por %p40, %p41
    %p44 = scmp.ne.s32.totalorder %s27, %s43
    %p45 = scmp.eq.s32.totalorder %s19, 0
    %p46 = por %p44, %p45
    %s48 = sadd.s32 %s47, 1
    %p51 = scmp.eq.s32.totalorder %s13, 1
    %p52 = scmp.ne.s32.totalorder %s47, %s49
    %p53 = scmp.eq.s32.totalorder %s13, 0
    %p54 = por %p52, %p53
    %p55 = scmp.ne.s32.totalorder %s47, %s49
    %p56 = scmp.eq.s32.totalorder %s18, 1
    %p57 = por %p55, %p56
    %p58 = scmp.ne.s32.totalorder %s49, %s50
    %p59 = scmp.eq.s32.totalorder %s18, 0
    %p60 = por %p58, %p59
    %p61 = scmp.ne.s32.totalorder %s49, %s50
    %p62 = scmp.eq.s32.totalorder %s19, 1
    %p63 = por %p61, %p62
    %p65 = scmp.ne.s32.totalorder %s50, %s64
    %p66 = scmp.eq.s32.totalorder %s19, 0
    %p67 = por %p65, %p66
    %s69 = sadd.s32 %s68, 1
    %p72 = scmp.eq.s32.totalorder %s13, 1
    %p73 = scmp.ne.s32.totalorder %s68, %s70
    %p74 = scmp.eq.s32.totalorder %s13, 0
    %p75 = por %p73, %p74
    %p76 = scmp.ne.s32.totalorder %s68, %s70
    %p77 = scmp.eq.s32.totalorder %s18, 1
    %p78 = por %p76, %p77
    %p79 = scmp.ne.s32.totalorder %s70, %s71
    %p80 = scmp.eq.s32.totalorder %s18, 0
    %p81 = por %p79, %p80
    %p82 = scmp.ne.s32.totalorder %s70, %s71
    %p83 = scmp.eq.s32.totalorder %s19, 1
    %p84 = por %p82, %p83
    %p86 = scmp.ne.s32.totalorder %s71, %s85
    %p87 = scmp.eq.s32.totalorder %s19, 0
    %p88 = por %p86, %p87
    %s90 = sadd.s32 %s89, 1
    %p93 = scmp.eq.s32.totalorder %s13, 1
    %p94 = scmp.ne.s32.totalorder %s89, %s91
    %p95 = scmp.eq.s32.totalorder %s13, 0
    %p96 = por %p94, %p95
    %p97 = scmp.ne.s32.totalorder %s89, %s91
    %p98 = scmp.eq.s32.totalorder %s18, 1
    %p99 = por %p97, %p98
    %p100 = scmp.ne.s32.totalorder %s91, %s92
    %p101 = scmp.eq.s32.totalorder %s18, 0
    %p102 = por %p100, %p101
    %p103 = scmp.ne.s32.totalorder %s91, %s92
    %p104 = scmp.eq.s32.totalorder %s19, 1
    %p105 = por %p103, %p104
    %p107 = scmp.ne.s32.totalorder %s92, %s106
    %p108 = scmp.eq.s32.totalorder %s19, 0
    %p109 = por %p107, %p108
    %s111 = sadd.s32 %s110, 1
    %p114 = scmp.eq.s32.totalorder %s13, 1
    %p115 = scmp.ne.s32.totalorder %s110, %s112
    %p116 = scmp.eq.s32.totalorder %s13, 0
    %p117 = por %p115, %p116
    %p118 = scmp.ne.s32.totalorder %s110, %s112
    %p119 = scmp.eq.s32.totalorder %s18, 1
    %p120 = por %p118, %p119
    %p121 = scmp.ne.s32.totalorder %s112, %s113
    %p122 = scmp.eq.s32.totalorder %s18, 0
    %p123 = por %p121, %p122
    %p124 = scmp.ne.s32.totalorder %s112, %s113
    %p125 = scmp.eq.s32.totalorder %s19, 1
    %p126 = por %p124, %p125
    %p128 = scmp.ne.s32.totalorder %s113, %s127
    %p129 = scmp.eq.s32.totalorder %s19, 0
    %p130 = por %p128, %p129
    %s132 = sadd.s32 %s131, 1
    %p135 = scmp.eq.s32.totalorder %s13, 1
    %p136 = scmp.ne.s32.totalorder %s131, %s133
    %p137 = scmp.eq.s32.totalorder %s13, 0
    %p138 = por %p136, %p137
    %p139 = scmp.ne.s32.totalorder %s131, %s133
    %p140 = scmp.eq.s32.totalorder %s18, 1
    %p141 = por %p139, %p140
    %p142 = scmp.ne.s32.totalorder %s133, %s134
    %p143 = scmp.eq.s32.totalorder %s18, 0
    %p144 = por %p142, %p143
    %p145 = scmp.ne.s32.totalorder %s133, %s134
    %p146 = scmp.eq.s32.totalorder %s19, 1
    %p147 = por %p145, %p146
    %p149 = scmp.ne.s32.totalorder %s134, %s148
    %p150 = scmp.eq.s32.totalorder %s19, 0
    %p151 = por %p149, %p150
    %s153 = sadd.s32 %s152, 1
    %p156 = scmp.eq.s32.totalorder %s13, 1
    %p157 = scmp.ne.s32.totalorder %s152, %s154
    %p158 = scmp.eq.s32.totalorder %s13, 0
    %p159 = por %p157, %p158
    %p160 = scmp.ne.s32.totalorder %s152, %s154
    %p161 = scmp.eq.s32.totalorder %s18, 1
    %p162 = por %p160, %p161
    %p163 = scmp.ne.s32.totalorder %s154, %s155
    %p164 = scmp.eq.s32.totalorder %s18, 0
    %p165 = por %p163, %p164
    %p166 = scmp.ne.s32.totalorder %s154, %s155
    %p167 = scmp.eq.s32.totalorder %s19, 1
    %p168 = por %p166, %p167
    %p170 = scmp.ne.s32.totalorder %s155, %s169
    %p171 = scmp.eq.s32.totalorder %s19, 0
    %p172 = por %p170, %p171
    %s173 = ssub.s32 %s13, %s20
    %p174 = scmp.eq.s32.totalorder %s173, 0
    %s176 = sadd.s32 %s175, 1
    %s177 = scalar_select %p174, %s175, %s176
    %p180 = pneg %p174
    %p181 = scmp.eq.s32.totalorder %s13, 1
    %p182 = por %p180, %p181
    %p183 = scmp.ne.s32.totalorder %s175, %s178
    %p184 = scmp.eq.s32.totalorder %s13, 0
    %p185 = por %p183, %p184
    %p186 = scmp.ne.s32.totalorder %s175, %s178
    %p187 = scmp.eq.s32.totalorder %s18, 1
    %p188 = por %p186, %p187
    %p189 = scmp.ne.s32.totalorder %s178, %s179
    %p190 = scmp.eq.s32.totalorder %s18, 0
    %p191 = por %p189, %p190
    %p192 = scmp.ne.s32.totalorder %s178, %s179
    %p193 = scmp.eq.s32.totalorder %s19, 1
    %p194 = por %p192, %p193
    %p196 = scmp.ne.s32.totalorder %s179, %s195
    %p197 = scmp.eq.s32.totalorder %s19, 0
    %p198 = por %p196, %p197
    %p199 = scmp.le.s32.totalorder 1, %s13
    %p200 = scmp.lt.s32.totalorder %s13, 3
    %p201 = pnand %p199, %p200
    %p202 = pneg %p201
    // Predicated region
    $region9: #{_lambda_.6} parent=5 // pred_check
      _
    $region10: #{_lambda_.6} parent=5 // pred_check_branch
      %204 = sbr.rel (%p201) target = $region12
    $region11: #{_lambda_.6} parent=5 // pred_region
      %s205 = ssub.s32 %s13, 1
      // Predicated region
      $region13: #{_lambda_.6} parent=11 // pred_check
        %p206 = pneg %p60
      $region14: #{_lambda_.6} parent=11 // pred_check_branch
        %208 = sbr.rel (%p206) target = $region16
      $region15: #{_lambda_.6} parent=11 // pred_region
        _
      $region16: #{_lambda_.6} parent=11 // pred_fallthru
        _
      // Predicated region
      $region17: #{_lambda_.6} parent=11 // pred_check
        %p209 = pneg %p81
      $region18: #{_lambda_.6} parent=11 // pred_check_branch
        %211 = sbr.rel (%p209) target = $region20
      $region19: #{_lambda_.6} parent=11 // pred_region
        _
      $region20: #{_lambda_.6} parent=11 // pred_fallthru
        _
      // Predicated region
      $region21: #{_lambda_.6} parent=11 // pred_check
        %p212 = pneg %p102
      $region22: #{_lambda_.6} parent=11 // pred_check_branch
        %214 = sbr.rel (%p212) target = $region24
      $region23: #{_lambda_.6} parent=11 // pred_region
        _
      $region24: #{_lambda_.6} parent=11 // pred_fallthru
        _
      // Predicated region
      $region25: #{_lambda_.6} parent=11 // pred_check
        %p215 = pneg %p123
      $region26: #{_lambda_.6} parent=11 // pred_check_branch
        %217 = sbr.rel (%p215) target = $region28
      $region27: #{_lambda_.6} parent=11 // pred_region
        _
      $region28: #{_lambda_.6} parent=11 // pred_fallthru
        _
      // Predicated region
      $region29: #{_lambda_.6} parent=11 // pred_check
        %p218 = pneg %p144
      $region30: #{_lambda_.6} parent=11 // pred_check_branch
        %220 = sbr.rel (%p218) target = $region32
      $region31: #{_lambda_.6} parent=11 // pred_region
        _
      $region32: #{_lambda_.6} parent=11 // pred_fallthru
        _
      // Predicated region
      $region33: #{_lambda_.6} parent=11 // pred_check
        %p221 = pneg %p165
      $region34: #{_lambda_.6} parent=11 // pred_check_branch
        %223 = sbr.rel (%p221) target = $region36
      $region35: #{_lambda_.6} parent=11 // pred_region
        _
      $region36: #{_lambda_.6} parent=11 // pred_fallthru
        _
    $region12: #{_lambda_.6} parent=5 // pred_fallthru
      _
    %p224 = scmp.lt.s32.totalorder %s13, 2
    // Predicated region
    $region37: #{_lambda_.6} parent=5 // pred_check
      %p225 = pneg %p224
    $region38: #{_lambda_.6} parent=5 // pred_check_branch
      %227 = sbr.rel (%p225) target = $region40
    $region39: #{_lambda_.6} parent=5 // pred_region
      // Predicated region
      $region41: #{_lambda_.6} parent=39 // pred_check
        %p228 = pneg %p33
      $region42: #{_lambda_.6} parent=39 // pred_check_branch
        %230 = sbr.rel (%p228) target = $region44
      $region43: #{_lambda_.6} parent=39 // pred_region
        %p231 = scmp.lt.s32.totalorder %s13, 1
        %s232 = scalar_select %p231, %s13, 1
        %s233 = smul.addr %s232, 8
        %s234 = scalar_lea.vmem %s0, %s233
      $region44: #{_lambda_.6} parent=39 // pred_fallthru
        _
    $region40: #{_lambda_.6} parent=5 // pred_fallthru
      _
    %p235 = scmp.le.s32.totalorder 1, %s13
    %p236 = scmp.lt.s32.totalorder %s13, 3
    %p237 = pnand %p235, %p236
    %p238 = pneg %p237
    // Predicated region
    $region45: #{_lambda_.6} parent=5 // pred_check
      _
    $region46: #{_lambda_.6} parent=5 // pred_check_branch
      %240 = sbr.rel (%p237) target = $region48
    $region47: #{_lambda_.6} parent=5 // pred_region
      %s241 = ssub.s32 %s13, 1
      %p242 = scmp.lt.s32.totalorder %s18, 1
      %s243 = scalar_select %p242, %s18, 1
      %s244 = smul.addr %s243, 8
      %s245 = scalar_lea.vmem %s0, %s244
      %p246 = pneg %p39
      %p247 = pneg %p36
      %p248 = pneg %p60
      %p249 = pneg %p57
      %p250 = pneg %p81
      %p251 = pneg %p78
      %p252 = pneg %p102
      %p253 = pneg %p99
      %p254 = pneg %p123
      %p255 = pneg %p120
      %p256 = pneg %p144
      %p257 = pneg %p141
      %p258 = pneg %p165
      %p259 = pneg %p162
      %p260 = pneg %p191
      %p261 = pneg %p188
      %p262 = scmp.lt.s32.totalorder %s18, 1
      %s263 = scalar_select %p262, %s18, 1
      %s264 = smul.addr %s263, 8
      %s265 = scalar_lea.vmem %s7, %s264
      %p266 = scmp.lt.s32.totalorder %s18, 1
      %s267 = scalar_select %p266, %s18, 1
      %s268 = smul.addr %s267, 8
      %s269 = scalar_lea.vmem %s0, %s268
      %p270 = scmp.lt.s32.totalorder %s18, 1
      %s271 = scalar_select %p270, %s18, 1
      %s272 = smul.addr %s271, 8
      %s273 = scalar_lea.vmem %s7, %s272
      %v275 = vld [vmem:[%s269] sm:$0x1f]
      %v276 = vld [vmem:[%s1] sm:$0x1]
      %v277 = vld [vmem:[%s2] sm:$0x1]
      %vm278 = vcmask 520192
      %v279 = vsel %vm278, %v275, 0.0
      %280 = vadd.xlane.f32.xlu0 %v279
      %v281 = vpop.xlane.xlu0 %280
      %v282 = vrcp.pop 64.0
      %v283 = vmul.f32 %v281, %v282
      %v284 = vsub.f32 %v275, %v283
      %v285 = vmul.f32 %v284, %v284
      %v286 = vsel %vm278, %v285, 0.0
      %287 = vadd.xlane.f32.xlu0 %v286
      %v288 = vpop.xlane.xlu0 %287
      %v289 = vmul.f32 %v288, %v282
      %v290 = vadd.f32 %v289, 1e-05
      %v291 = vrsqrt.pop %v290
      %v292 = vmul.f32 %v284, %v291
      %v294 = vlaneseq
      %v295 = vshrl.u32 %v294, 7
      %v296 = vsub.s32 0, %v295
      %v297 = vrot.slane %v276, %v296
      %v299 = vmul.f32 %v292, %v297
      %v301 = vlaneseq
      %v302 = vshrl.u32 %v301, 7
      %v303 = vsub.s32 0, %v302
      %v304 = vrot.slane %v277, %v303
      %v306 = vadd.f32 %v299, %v304
      %v307 = vpack.c.bf16 %v306, %v306
      %v308 = vld [vmem:[%s3] sm:$0xff]
      %v309 = vld [vmem:[%s3 + $0x8] sm:$0xff]
      %v310 = vld [vmem:[%s3 + $0x10] sm:$0xff]
      %v311 = vld [vmem:[%s3 + $0x18] sm:$0xff]
      %v312 = vld [vmem:[%s3 + $0x20] sm:$0xff]
      %v313 = vld [vmem:[%s3 + $0x28] sm:$0xff]
      %v314 = vld [vmem:[%s3 + $0x30] sm:$0xff]
      %v315 = vld [vmem:[%s3 + $0x38] sm:$0xff]
      %v316 = vld [vmem:[%s4] sm:$0x3]
      %v318 = vlaneseq
      %v319 = vshrl.u32 %v318, 7
      %v320 = vsub.s32 0, %v319
      %v321 = vrot.slane %v316, %v320
      %v322 = vlaneseq
      %v323 = vshrl.u32 %v322, 7
      %v324 = vsub.s32 1, %v323
      %v325 = vrot.slane %v316, %v324
      %v336 = vunpack.c.l.b16 %v308
      %v337 = vunpack.c.h.b16 %v308
      %v338 = vunpack.c.l.b16 %v309
      %v339 = vunpack.c.h.b16 %v309
      %v340 = vunpack.c.l.b16 %v310
      %v341 = vunpack.c.h.b16 %v310
      %v342 = vunpack.c.l.b16 %v311
      %v343 = vunpack.c.h.b16 %v311
      %v344 = vunpack.c.l.b16 %v312
      %v345 = vunpack.c.h.b16 %v312
      %v346 = vunpack.c.l.b16 %v313
      %v347 = vunpack.c.h.b16 %v313
      %v348 = vunpack.c.l.b16 %v314
      %v349 = vunpack.c.h.b16 %v314
      %v350 = vunpack.c.l.b16 %v315
      %v351 = vunpack.c.h.b16 %v315
      %v352 = vpack.c.b16 %v338, %v336
      %v353 = vpack.c.b16 %v339, %v337
      %v354 = vpack.c.b16 %v342, %v340
      %v355 = vpack.c.b16 %v343, %v341
      %v356 = vpack.c.b16 %v346, %v344
      %v357 = vpack.c.b16 %v347, %v345
      %v358 = vpack.c.b16 %v350, %v348
      %v359 = vpack.c.b16 %v351, %v349
      %vm368 = vcmask 523264
      %v370 = vsel %vm368, %v307, 0
      %372 = vmatprep.subr.bf16.mxu0 %v353
      %373 = vmatpush1.bf16.msra.mxu0 %v352
      %374 = vmatprep.subr.bf16.mxu0 %v355
      %375 = vmatpush1.bf16.msra.mxu0 %v354
      %376 = vmatprep.subr.bf16.mxu0 %v357
      %377 = vmatpush1.bf16.msra.mxu0 %v356
      %378 = vmatprep.subr.bf16.mxu0 %v359
      %379 = vmatpush1.bf16.msra.mxu0 %v358
      %380 = vmatprep.subr.bf16.mxu0 0
      %381 = vmatpush1.bf16.msra.mxu0 0
      %382 = vmatprep.subr.bf16.mxu0 0
      %383 = vmatpush1.bf16.msra.mxu0 0
      %384 = vmatprep.subr.bf16.mxu0 0
      %385 = vmatpush1.bf16.msra.mxu0 0
      %386 = vmatprep.subr.bf16.mxu0 0
      %387 = vmatpush1.bf16.msra.mxu0 0
      %388 = vmatprep.subr.bf16.mxu0 0
      %389 = vmatpush1.bf16.msra.mxu0 0
      %390 = vmatprep.subr.bf16.mxu0 0
      %391 = vmatpush1.bf16.msra.mxu0 0
      %392 = vmatprep.subr.bf16.mxu0 0
      %393 = vmatpush1.bf16.msra.mxu0 0
      %394 = vmatprep.subr.bf16.mxu0 0
      %395 = vmatpush1.bf16.msra.mxu0 0
      %396 = vmatprep.subr.bf16.mxu0 0
      %397 = vmatpush1.bf16.msra.mxu0 0
      %398 = vmatprep.subr.bf16.mxu0 0
      %399 = vmatpush1.bf16.msra.mxu0 0
      %400 = vmatprep.subr.bf16.mxu0 0
      %401 = vmatpush1.bf16.msra.mxu0 0
      %402 = vmatprep.subr.bf16.mxu0 0
      %403 = vmatpush1.bf16.msra.mxu0 0
      %404 = vmatprep.mubr.bf16.mxu0 0
      %405 = vmatmul.mubr.bf16.gmra.mrb[0].mxu0 %v370
      %v406 = vpop.f32.mrb[0].mxu0
      %v407 = vadd.f32 %v321, %v406
      %v408 = vpop.f32.mrb[0].mxu0
      %v409 = vadd.f32 %v325, %v408
      %v410 = vpop.f32.mrb[0].mxu0
      %v411 = vpop.f32.mrb[0].mxu0
      %412 = vdwg.mxu0
      %v413 = vld [vmem:[%s5] sm:$0xf]
      %v414 = vld [vmem:[%s5 + $0x4] sm:$0xf]
      %v415 = vld [vmem:[%s5 + $0x8] sm:$0xf]
      %v416 = vld [vmem:[%s5 + $0xc] sm:$0xf]
      %v417 = vld [vmem:[%s5 + $0x10] sm:$0xf]
      %v418 = vld [vmem:[%s5 + $0x14] sm:$0xf]
      %v419 = vld [vmem:[%s5 + $0x18] sm:$0xf]
      %v420 = vld [vmem:[%s5 + $0x1c] sm:$0xf]
      %v421 = vpack.c.bf16 %v407, %v407
      %v422 = vpack.c.bf16 %v409, %v409
      %424 = vrot.lane.b32.xlu0 %v421, 64
      %v425 = vpop.permute.xlu0 %424
      %vm426 = vcmask 130048
      %v428 = vsel %vm426, %v421, 0
      %v431 = vsel %vm426, %v425, 0
      %433 = vmatprep.subr.bf16.mxu0 0
      %434 = vmatpush1.bf16.xpose.msra.mxu0 %v431
      %435 = vmatprep.subr.bf16.mxu0 0
      %436 = vmatpush1.bf16.xpose.msra.mxu0 0
      %437 = vmatprep.subr.bf16.mxu0 0
      %438 = vmatpush1.bf16.xpose.msra.mxu0 0
      %439 = vmatprep.subr.bf16.mxu0 0
      %440 = vmatpush1.bf16.xpose.msra.mxu0 0
      %441 = vmatprep.subr.bf16.mxu0 0
      %442 = vmatpush1.bf16.xpose.msra.mxu0 0
      %443 = vmatprep.subr.bf16.mxu0 0
      %444 = vmatpush1.bf16.xpose.msra.mxu0 0
      %445 = vmatprep.subr.bf16.mxu0 0
      %446 = vmatpush1.bf16.xpose.msra.mxu0 0
      %447 = vmatprep.subr.bf16.mxu0 0
      %448 = vmatpush1.bf16.xpose.msra.mxu0 0
      %449 = vmatprep.subr.bf16.mxu0 0
      %450 = vmatpush1.bf16.xpose.msra.mxu0 0
      %451 = vmatprep.subr.bf16.mxu0 0
      %452 = vmatpush1.bf16.xpose.msra.mxu0 0
      %453 = vmatprep.subr.bf16.mxu0 0
      %454 = vmatpush1.bf16.xpose.msra.mxu0 0
      %455 = vmatprep.subr.bf16.mxu0 0
      %456 = vmatpush1.bf16.xpose.msra.mxu0 0
      %457 = vmatprep.subr.bf16.mxu0 0
      %458 = vmatpush1.bf16.xpose.msra.mxu0 0
      %459 = vmatprep.subr.bf16.mxu0 0
      %460 = vmatpush1.bf16.xpose.msra.mxu0 0
      %461 = vmatprep.subr.bf16.mxu0 0
      %462 = vmatpush1.bf16.xpose.msra.mxu0 0
      %463 = vmatprep.subr.bf16.mxu0 0
      %464 = vmatpush1.bf16.xpose.msra.mxu0 0
      %465 = vmatprep.mubr.bf16.mxu0 0
      %466 = vmatmul.mubr.bf16.gmra.mrb[0].mxu0 %v428
      %v467 = vpop.f32.mrb[0].mxu0
      %v468 = vadd.f32 0.0, %v467
      %v469 = vpop.f32.mrb[0].mxu0
      %v470 = vpop.f32.mrb[0].mxu0
      %v471 = vpop.f32.mrb[0].mxu0
      %472 = vdwg.mxu0
      %v473 = vmul.f32 %v468, 0.25
      %vm474 = vcmask 36864
      %v475 = vsel %vm474, %v473, -inf
      %476 = vmax.xlane.f32.xlu0 %v475
      %v477 = vpop.xlane.xlu0 %476
      %v478 = vsub.f32 %v473, %v477
      %v479 = vmul.f32 %v478, 1.442695
      %v480 = vpow.pop %v479
      %v481 = vsel %vm474, %v480, 0.0
      %482 = vadd.xlane.f32.xlu0 %v481
      %v483 = vpop.xlane.xlu0 %482
      %v484 = vrcp.pop %v483
      %v485 = vmul.f32 %v480, %v484
      %v486 = vpack.c.bf16 %v485, %v485
      %vm487 = vcmask 39936
      %v489 = vsel %vm487, %v486, 0
      %vm491 = vcmask 1041408
      %vm492 = vcmask 1042432
      %v493 = vsel %vm491, 4294967295, 65535
      %v494 = vsel %vm492, %v493, 0
      %v496 = vand.u32 %v422, %v494
      %498 = vmatprep.subr.bf16.mxu0 0
      %499 = vmatpush1.bf16.msra.mxu0 %v496
      %500 = vmatprep.subr.bf16.mxu0 0
      %501 = vmatpush1.bf16.msra.mxu0 0
      %502 = vmatprep.subr.bf16.mxu0 0
      %503 = vmatpush1.bf16.msra.mxu0 0
      %504 = vmatprep.subr.bf16.mxu0 0
      %505 = vmatpush1.bf16.msra.mxu0 0
      %506 = vmatprep.subr.bf16.mxu0 0
      %507 = vmatpush1.bf16.msra.mxu0 0
      %508 = vmatprep.subr.bf16.mxu0 0
      %509 = vmatpush1.bf16.msra.mxu0 0
      %510 = vmatprep.subr.bf16.mxu0 0
      %511 = vmatpush1.bf16.msra.mxu0 0
      %512 = vmatprep.subr.bf16.mxu0 0
      %513 = vmatpush1.bf16.msra.mxu0 0
      %514 = vmatprep.subr.bf16.mxu0 0
      %515 = vmatpush1.bf16.msra.mxu0 0
      %516 = vmatprep.subr.bf16.mxu0 0
      %517 = vmatpush1.bf16.msra.mxu0 0
      %518 = vmatprep.subr.bf16.mxu0 0
      %519 = vmatpush1.bf16.msra.mxu0 0
      %520 = vmatprep.subr.bf16.mxu0 0
      %521 = vmatpush1.bf16.msra.mxu0 0
      %522 = vmatprep.subr.bf16.mxu0 0
      %523 = vmatpush1.bf16.msra.mxu0 0
      %524 = vmatprep.subr.bf16.mxu0 0
      %525 = vmatpush1.bf16.msra.mxu0 0
      %526 = vmatprep.subr.bf16.mxu0 0
      %527 = vmatpush1.bf16.msra.mxu0 0
      %528 = vmatprep.subr.bf16.mxu0 0
      %529 = vmatpush1.bf16.msra.mxu0 0
      %530 = vmatprep.mubr.bf16.mxu0 0
      %531 = vmatmul.mubr.bf16.gmra.mrb[0].mxu0 %v489
      %v532 = vpop.f32.mrb[0].mxu0
      %v533 = vadd.f32 0.0, %v532
      %v534 = vpop.f32.mrb[0].mxu0
      %v535 = vpop.f32.mrb[0].mxu0
      %v536 = vpop.f32.mrb[0].mxu0
      %537 = vdwg.mxu0
      %v538 = vpack.c.bf16 %v533, %v533
      %539 = vrot.lane.b32.xlu0 %v421, 112
      %v540 = vpop.permute.xlu0 %539
      %541 = vrot.lane.b32.xlu0 %v421, 48
      %v542 = vpop.permute.xlu0 %541
      %v544 = vsel %vm426, %v540, 0
      %v547 = vsel %vm426, %v542, 0
      %549 = vmatprep.subr.bf16.mxu0 0
      %550 = vmatpush1.bf16.xpose.msra.mxu0 %v547
      %551 = vmatprep.subr.bf16.mxu0 0
      %552 = vmatpush1.bf16.xpose.msra.mxu0 0
      %553 = vmatprep.subr.bf16.mxu0 0
      %554 = vmatpush1.bf16.xpose.msra.mxu0 0
      %555 = vmatprep.subr.bf16.mxu0 0
      %556 = vmatpush1.bf16.xpose.msra.mxu0 0
      %557 = vmatprep.subr.bf16.mxu0 0
      %558 = vmatpush1.bf16.xpose.msra.mxu0 0
      %559 = vmatprep.subr.bf16.mxu0 0
      %560 = vmatpush1.bf16.xpose.msra.mxu0 0
      %561 = vmatprep.subr.bf16.mxu0 0
      %562 = vmatpush1.bf16.xpose.msra.mxu0 0
      %563 = vmatprep.subr.bf16.mxu0 0
      %564 = vmatpush1.bf16.xpose.msra.mxu0 0
      %565 = vmatprep.subr.bf16.mxu0 0
      %566 = vmatpush1.bf16.xpose.msra.mxu0 0
      %567 = vmatprep.subr.bf16.mxu0 0
      %568 = vmatpush1.bf16.xpose.msra.mxu0 0
      %569 = vmatprep.subr.bf16.mxu0 0
      %570 = vmatpush1.bf16.xpose.msra.mxu0 0
      %571 = vmatprep.subr.bf16.mxu0 0
      %572 = vmatpush1.bf16.xpose.msra.mxu0 0
      %573 = vmatprep.subr.bf16.mxu0 0
      %574 = vmatpush1.bf16.xpose.msra.mxu0 0
      %575 = vmatprep.subr.bf16.mxu0 0
      %576 = vmatpush1.bf16.xpose.msra.mxu0 0
      %577 = vmatprep.subr.bf16.mxu0 0
      %578 = vmatpush1.bf16.xpose.msra.mxu0 0
      %579 = vmatprep.subr.bf16.mxu0 0
      %580 = vmatpush1.bf16.xpose.msra.mxu0 0
      %581 = vmatprep.mubr.bf16.mxu0 0
      %582 = vmatmul.mubr.bf16.gmra.mrb[0].mxu0 %v544
      %v583 = vpop.f32.mrb[0].mxu0
      %v584 = vadd.f32 0.0, %v583
      %v585 = vpop.f32.mrb[0].mxu0
      %v586 = vpop.f32.mrb[0].mxu0
      %v587 = vpop.f32.mrb[0].mxu0
      %588 = vdwg.mxu0
      %v589 = vmul.f32 %v584, 0.25
      %v590 = vsel %vm474, %v589, -inf
      %591 = vmax.xlane.f32.xlu0 %v590
      %v592 = vpop.xlane.xlu0 %591
      %v593 = vsub.f32 %v589, %v592
      %v594 = vmul.f32 %v593, 1.442695
      %v595 = vpow.pop %v594
      %v596 = vsel %vm474, %v595, 0.0
      %597 = vadd.xlane.f32.xlu0 %v596
      %v598 = vpop.xlane.xlu0 %597
      %v599 = vrcp.pop %v598
      %v600 = vmul.f32 %v595, %v599
      %v601 = vpack.c.bf16 %v600, %v600
      %603 = vrot.lane.b32.xlu0 %v422, 112
      %v604 = vpop.permute.xlu0 %603
      %v606 = vsel %vm487, %v601, 0
      %v609 = vand.u32 %v604, %v494
      %611 = vmatprep.subr.bf16.mxu0 0
      %612 = vmatpush1.bf16.msra.mxu0 %v609
      %613 = vmatprep.subr.bf16.mxu0 0
      %614 = vmatpush1.bf16.msra.mxu0 0
      %615 = vmatprep.subr.bf16.mxu0 0
      %616 = vmatpush1.bf16.msra.mxu0 0
      %617 = vmatprep.subr.bf16.mxu0 0
      %618 = vmatpush1.bf16.msra.mxu0 0
      %619 = vmatprep.subr.bf16.mxu0 0
      %620 = vmatpush1.bf16.msra.mxu0 0
      %621 = vmatprep.subr.bf16.mxu0 0
      %622 = vmatpush1.bf16.msra.mxu0 0
      %623 = vmatprep.subr.bf16.mxu0 0
      %624 = vmatpush1.bf16.msra.mxu0 0
      %625 = vmatprep.subr.bf16.mxu0 0
      %626 = vmatpush1.bf16.msra.mxu0 0
      %627 = vmatprep.subr.bf16.mxu0 0
      %628 = vmatpush1.bf16.msra.mxu0 0
      %629 = vmatprep.subr.bf16.mxu0 0
      %630 = vmatpush1.bf16.msra.mxu0 0
      %631 = vmatprep.subr.bf16.mxu0 0
      %632 = vmatpush1.bf16.msra.mxu0 0
      %633 = vmatprep.subr.bf16.mxu0 0
      %634 = vmatpush1.bf16.msra.mxu0 0
      %635 = vmatprep.subr.bf16.mxu0 0
      %636 = vmatpush1.bf16.msra.mxu0 0
      %637 = vmatprep.subr.bf16.mxu0 0
      %638 = vmatpush1.bf16.msra.mxu0 0
      %639 = vmatprep.subr.bf16.mxu0 0
      %640 = vmatpush1.bf16.msra.mxu0 0
      %641 = vmatprep.subr.bf16.mxu0 0
      %642 = vmatpush1.bf16.msra.mxu0 0
      %643 = vmatprep.mubr.bf16.mxu0 0
      %644 = vmatmul.mubr.bf16.gmra.mrb[0].mxu0 %v606
      %v645 = vpop.f32.mrb[0].mxu0
      %v646 = vadd.f32 0.0, %v645
      %v647 = vpop.f32.mrb[0].mxu0
      %v648 = vpop.f32.mrb[0].mxu0
      %v649 = vpop.f32.mrb[0].mxu0
      %650 = vdwg.mxu0
      %v651 = vpack.c.bf16 %v646, %v646
      %v654 = vunpack.c.l.b16 %v415
      %v655 = vunpack.c.l.b16 %v416
      %v656 = vpack.c.b16 %v655, %v654
      %v659 = vsel %vm426, %v651, 0
      %661 = vmatprep.subr.bf16.mxu0 0
      %662 = vmatpush1.bf16.msra.mxu0 %v656
      %663 = vmatprep.subr.bf16.mxu0 0
      %664 = vmatpush1.bf16.msra.mxu0 0
      %665 = vmatprep.subr.bf16.mxu0 0
      %666 = vmatpush1.bf16.msra.mxu0 0
      %667 = vmatprep.subr.bf16.mxu0 0
      %668 = vmatpush1.bf16.msra.mxu0 0
      %669 = vmatprep.subr.bf16.mxu0 0
      %670 = vmatpush1.bf16.msra.mxu0 0
      %671 = vmatprep.subr.bf16.mxu0 0
      %672 = vmatpush1.bf16.msra.mxu0 0
      %673 = vmatprep.subr.bf16.mxu0 0
      %674 = vmatpush1.bf16.msra.mxu0 0
      %675 = vmatprep.subr.bf16.mxu0 0
      %676 = vmatpush1.bf16.msra.mxu0 0
      %677 = vmatprep.subr.bf16.mxu0 0
      %678 = vmatpush1.bf16.msra.mxu0 0
      %679 = vmatprep.subr.bf16.mxu0 0
      %680 = vmatpush1.bf16.msra.mxu0 0
      %681 = vmatprep.subr.bf16.mxu0 0
      %682 = vmatpush1.bf16.msra.mxu0 0
      %683 = vmatprep.subr.bf16.mxu0 0
      %684 = vmatpush1.bf16.msra.mxu0 0
      %685 = vmatprep.subr.bf16.mxu0 0
      %686 = vmatpush1.bf16.msra.mxu0 0
      %687 = vmatprep.subr.bf16.mxu0 0
      %688 = vmatpush1.bf16.msra.mxu0 0
      %689 = vmatprep.subr.bf16.mxu0 0
      %690 = vmatpush1.bf16.msra.mxu0 0
      %691 = vmatprep.subr.bf16.mxu0 0
      %692 = vmatpush1.bf16.msra.mxu0 0
      %693 = vmatprep.mubr.bf16.mxu0 0
      %694 = vmatmul.mubr.bf16.gmra.mrb[0].mxu0 %v659
      %v695 = vpop.f32.mrb[0].mxu0
      %v696 = vadd.f32 0.0, %v695
      %v697 = vpop.f32.mrb[0].mxu0
      %v698 = vpop.f32.mrb[0].mxu0
      %v699 = vpop.f32.mrb[0].mxu0
      %700 = vdwg.mxu0
      %v703 = vunpack.c.l.b16 %v413
      %v704 = vunpack.c.l.b16 %v414
      %v705 = vpack.c.b16 %v704, %v703
      %v708 = vsel %vm426, %v538, 0
      %710 = vmatprep.subr.bf16.mxu0 0
      %711 = vmatpush1.bf16.msra.mxu0 %v705
      %712 = vmatprep.subr.bf16.mxu0 0
      %713 = vmatpush1.bf16.msra.mxu0 0
      %714 = vmatprep.subr.bf16.mxu0 0
      %715 = vmatpush1.bf16.msra.mxu0 0
      %716 = vmatprep.subr.bf16.mxu0 0
      %717 = vmatpush1.bf16.msra.mxu0 0
      %718 = vmatprep.subr.bf16.mxu0 0
      %719 = vmatpush1.bf16.msra.mxu0 0
      %720 = vmatprep.subr.bf16.mxu0 0
      %721 = vmatpush1.bf16.msra.mxu0 0
      %722 = vmatprep.subr.bf16.mxu0 0
      %723 = vmatpush1.bf16.msra.mxu0 0
      %724 = vmatprep.subr.bf16.mxu0 0
      %725 = vmatpush1.bf16.msra.mxu0 0
      %726 = vmatprep.subr.bf16.mxu0 0
      %727 = vmatpush1.bf16.msra.mxu0 0
      %728 = vmatprep.subr.bf16.mxu0 0
      %729 = vmatpush1.bf16.msra.mxu0 0
      %730 = vmatprep.subr.bf16.mxu0 0
      %731 = vmatpush1.bf16.msra.mxu0 0
      %732 = vmatprep.subr.bf16.mxu0 0
      %733 = vmatpush1.bf16.msra.mxu0 0
      %734 = vmatprep.subr.bf16.mxu0 0
      %735 = vmatpush1.bf16.msra.mxu0 0
      %736 = vmatprep.subr.bf16.mxu0 0
      %737 = vmatpush1.bf16.msra.mxu0 0
      %738 = vmatprep.subr.bf16.mxu0 0
      %739 = vmatpush1.bf16.msra.mxu0 0
      %740 = vmatprep.subr.bf16.mxu0 0
      %741 = vmatpush1.bf16.msra.mxu0 0
      %742 = vmatprep.mubr.bf16.mxu0 0
      %743 = vmatmul.mubr.bf16.gmra.mrb[0].mxu0 %v708
      %v744 = vpop.f32.mrb[0].mxu0
      %v745 = vadd.f32 %v696, %v744
      %v746 = vpop.f32.mrb[0].mxu0
      %v747 = vpop.f32.mrb[0].mxu0
      %v748 = vpop.f32.mrb[0].mxu0
      %749 = vdwg.mxu0
      %750 = vrot.lane.b32.xlu0 %v421, 96
      %v751 = vpop.permute.xlu0 %750
      %752 = vrot.lane.b32.xlu0 %v421, 32
      %v753 = vpop.permute.xlu0 %752
      %v755 = vsel %vm426, %v751, 0
      %v758 = vsel %vm426, %v753, 0
      %760 = vmatprep.subr.bf16.mxu0 0
      %761 = vmatpush1.bf16.xpose.msra.mxu0 %v758
      %762 = vmatprep.subr.bf16.mxu0 0
      %763 = vmatpush1.bf16.xpose.msra.mxu0 0
      %764 = vmatprep.subr.bf16.mxu0 0
      %765 = vmatpush1.bf16.xpose.msra.mxu0 0
      %766 = vmatprep.subr.bf16.mxu0 0
      %767 = vmatpush1.bf16.xpose.msra.mxu0 0
      %768 = vmatprep.subr.bf16.mxu0 0
      %769 = vmatpush1.bf16.xpose.msra.mxu0 0
      %770 = vmatprep.subr.bf16.mxu0 0
      %771 = vmatpush1.bf16.xpose.msra.mxu0 0
      %772 = vmatprep.subr.bf16.mxu0 0
      %773 = vmatpush1.bf16.xpose.msra.mxu0 0
      %774 = vmatprep.subr.bf16.mxu0 0
      %775 = vmatpush1.bf16.xpose.msra.mxu0 0
      %776 = vmatprep.subr.bf16.mxu0 0
      %777 = vmatpush1.bf16.xpose.msra.mxu0 0
      %778 = vmatprep.subr.bf16.mxu0 0
      %779 = vmatpush1.bf16.xpose.msra.mxu0 0
      %780 = vmatprep.subr.bf16.mxu0 0
      %781 = vmatpush1.bf16.xpose.msra.mxu0 0
      %782 = vmatprep.subr.bf16.mxu0 0
      %783 = vmatpush1.bf16.xpose.msra.mxu0 0
      %784 = vmatprep.subr.bf16.mxu0 0
      %785 = vmatpush1.bf16.xpose.msra.mxu0 0
      %786 = vmatprep.subr.bf16.mxu0 0
      %787 = vmatpush1.bf16.xpose.msra.mxu0 0
      %788 = vmatprep.subr.bf16.mxu0 0
      %789 = vmatpush1.bf16.xpose.msra.mxu0 0
      %790 = vmatprep.subr.bf16.mxu0 0
      %791 = vmatpush1.bf16.xpose.msra.mxu0 0
      %792 = vmatprep.mubr.bf16.mxu0 0
      %793 = vmatmul.mubr.bf16.gmra.mrb[0].mxu0 %v755
      %v794 = vpop.f32.mrb[0].mxu0
      %v795 = vadd.f32 0.0, %v794
      %v796 = vpop.f32.mrb[0].mxu0
      %v797 = vpop.f32.mrb[0].mxu0
      %v798 = vpop.f32.mrb[0].mxu0
      %799 = vdwg.mxu0
      %v800 = vmul.f32 %v795, 0.25
      %v801 = vsel %vm474, %v800, -inf
      %802 = vmax.xlane.f32.xlu0 %v801
      %v803 = vpop.xlane.xlu0 %802
      %v804 = vsub.f32 %v800, %v803
      %v805 = vmul.f32 %v804, 1.442695
      %v806 = vpow.pop %v805
      %v807 = vsel %vm474, %v806, 0.0
      %808 = vadd.xlane.f32.xlu0 %v807
      %v809 = vpop.xlane.xlu0 %808
      %v810 = vrcp.pop %v809
      %v811 = vmul.f32 %v806, %v810
      %v812 = vpack.c.bf16 %v811, %v811
      %813 = vrot.lane.b32.xlu0 %v422, 96
      %v814 = vpop.permute.xlu0 %813
      %v816 = vsel %vm487, %v812, 0
      %v819 = vand.u32 %v814, %v494
      %821 = vmatprep.subr.bf16.mxu0 0
      %822 = vmatpush1.bf16.msra.mxu0 %v819
      %823 = vmatprep.subr.bf16.mxu0 0
      %824 = vmatpush1.bf16.msra.mxu0 0
      %825 = vmatprep.subr.bf16.mxu0 0
      %826 = vmatpush1.bf16.msra.mxu0 0
      %827 = vmatprep.subr.bf16.mxu0 0
      %828 = vmatpush1.bf16.msra.mxu0 0
      %829 = vmatprep.subr.bf16.mxu0 0
      %830 = vmatpush1.bf16.msra.mxu0 0
      %831 = vmatprep.subr.bf16.mxu0 0
      %832 = vmatpush1.bf16.msra.mxu0 0
      %833 = vmatprep.subr.bf16.mxu0 0
      %834 = vmatpush1.bf16.msra.mxu0 0
      %835 = vmatprep.subr.bf16.mxu0 0
      %836 = vmatpush1.bf16.msra.mxu0 0
      %837 = vmatprep.subr.bf16.mxu0 0
      %838 = vmatpush1.bf16.msra.mxu0 0
      %839 = vmatprep.subr.bf16.mxu0 0
      %840 = vmatpush1.bf16.msra.mxu0 0
      %841 = vmatprep.subr.bf16.mxu0 0
      %842 = vmatpush1.bf16.msra.mxu0 0
      %843 = vmatprep.subr.bf16.mxu0 0
      %844 = vmatpush1.bf16.msra.mxu0 0
      %845 = vmatprep.subr.bf16.mxu0 0
      %846 = vmatpush1.bf16.msra.mxu0 0
      %847 = vmatprep.subr.bf16.mxu0 0
      %848 = vmatpush1.bf16.msra.mxu0 0
      %849 = vmatprep.subr.bf16.mxu0 0
      %850 = vmatpush1.bf16.msra.mxu0 0
      %851 = vmatprep.subr.bf16.mxu0 0
      %852 = vmatpush1.bf16.msra.mxu0 0
      %853 = vmatprep.mubr.bf16.mxu0 0
      %854 = vmatmul.mubr.bf16.gmra.mrb[0].mxu0 %v816
      %v855 = vpop.f32.mrb[0].mxu0
      %v856 = vadd.f32 0.0, %v855
      %v857 = vpop.f32.mrb[0].mxu0
      %v858 = vpop.f32.mrb[0].mxu0
      %v859 = vpop.f32.mrb[0].mxu0
      %860 = vdwg.mxu0
      %v861 = vpack.c.bf16 %v856, %v856
      %v864 = vunpack.c.l.b16 %v417
      %v865 = vunpack.c.l.b16 %v418
      %v866 = vpack.c.b16 %v865, %v864
      %v869 = vsel %vm426, %v861, 0
      %871 = vmatprep.subr.bf16.mxu0 0
      %872 = vmatpush1.bf16.msra.mxu0 %v866
      %873 = vmatprep.subr.bf16.mxu0 0
      %874 = vmatpush1.bf16.msra.mxu0 0
      %875 = vmatprep.subr.bf16.mxu0 0
      %876 = vmatpush1.bf16.msra.mxu0 0
      %877 = vmatprep.subr.bf16.mxu0 0
      %878 = vmatpush1.bf16.msra.mxu0 0
      %879 = vmatprep.subr.bf16.mxu0 0
      %880 = vmatpush1.bf16.msra.mxu0 0
      %881 = vmatprep.subr.bf16.mxu0 0
      %882 = vmatpush1.bf16.msra.mxu0 0
      %883 = vmatprep.subr.bf16.mxu0 0
      %884 = vmatpush1.bf16.msra.mxu0 0
      %885 = vmatprep.subr.bf16.mxu0 0
      %886 = vmatpush1.bf16.msra.mxu0 0
      %887 = vmatprep.subr.bf16.mxu0 0
      %888 = vmatpush1.bf16.msra.mxu0 0
      %889 = vmatprep.subr.bf16.mxu0 0
      %890 = vmatpush1.bf16.msra.mxu0 0
      %891 = vmatprep.subr.bf16.mxu0 0
      %892 = vmatpush1.bf16.msra.mxu0 0
      %893 = vmatprep.subr.bf16.mxu0 0
      %894 = vmatpush1.bf16.msra.mxu0 0
      %895 = vmatprep.subr.bf16.mxu0 0
      %896 = vmatpush1.bf16.msra.mxu0 0
      %897 = vmatprep.subr.bf16.mxu0 0
      %898 = vmatpush1.bf16.msra.mxu0 0
      %899 = vmatprep.subr.bf16.mxu0 0
      %900 = vmatpush1.bf16.msra.mxu0 0
      %901 = vmatprep.subr.bf16.mxu0 0
      %902 = vmatpush1.bf16.msra.mxu0 0
      %903 = vmatprep.mubr.bf16.mxu0 0
      %904 = vmatmul.mubr.bf16.gmra.mrb[0].mxu0 %v869
      %v905 = vpop.f32.mrb[0].mxu0
      %v906 = vadd.f32 0.0, %v905
      %v907 = vpop.f32.mrb[0].mxu0
      %v908 = vpop.f32.mrb[0].mxu0
      %v909 = vpop.f32.mrb[0].mxu0
      %910 = vdwg.mxu0
      %v911 = vadd.f32 %v745, %v906
      %912 = vrot.lane.b32.xlu0 %v421, 80
      %v913 = vpop.permute.xlu0 %912
      %914 = vrot.lane.b32.xlu0 %v421, 16
      %v915 = vpop.permute.xlu0 %914
      %v917 = vsel %vm426, %v913, 0
      %v920 = vsel %vm426, %v915, 0
      %922 = vmatprep.subr.bf16.mxu0 0
      %923 = vmatpush1.bf16.xpose.msra.mxu0 %v920
      %924 = vmatprep.subr.bf16.mxu0 0
      %925 = vmatpush1.bf16.xpose.msra.mxu0 0
      %926 = vmatprep.subr.bf16.mxu0 0
      %927 = vmatpush1.bf16.xpose.msra.mxu0 0
      %928 = vmatprep.subr.bf16.mxu0 0
      %929 = vmatpush1.bf16.xpose.msra.mxu0 0
      %930 = vmatprep.subr.bf16.mxu0 0
      %931 = vmatpush1.bf16.xpose.msra.mxu0 0
      %932 = vmatprep.subr.bf16.mxu0 0
      %933 = vmatpush1.bf16.xpose.msra.mxu0 0
      %934 = vmatprep.subr.bf16.mxu0 0
      %935 = vmatpush1.bf16.xpose.msra.mxu0 0
      %936 = vmatprep.subr.bf16.mxu0 0
      %937 = vmatpush1.bf16.xpose.msra.mxu0 0
      %938 = vmatprep.subr.bf16.mxu0 0
      %939 = vmatpush1.bf16.xpose.msra.mxu0 0
      %940 = vmatprep.subr.bf16.mxu0 0
      %941 = vmatpush1.bf16.xpose.msra.mxu0 0
      %942 = vmatprep.subr.bf16.mxu0 0
      %943 = vmatpush1.bf16.xpose.msra.mxu0 0
      %944 = vmatprep.subr.bf16.mxu0 0
      %945 = vmatpush1.bf16.xpose.msra.mxu0 0
      %946 = vmatprep.subr.bf16.mxu0 0
      %947 = vmatpush1.bf16.xpose.msra.mxu0 0
      %948 = vmatprep.subr.bf16.mxu0 0
      %949 = vmatpush1.bf16.xpose.msra.mxu0 0
      %950 = vmatprep.subr.bf16.mxu0 0
      %951 = vmatpush1.bf16.xpose.msra.mxu0 0
      %952 = vmatprep.subr.bf16.mxu0 0
      %953 = vmatpush1.bf16.xpose.msra.mxu0 0
      %954 = vmatprep.mubr.bf16.mxu0 0
      %955 = vmatmul.mubr.bf16.gmra.mrb[0].mxu0 %v917
      %v956 = vpop.f32.mrb[0].mxu0
      %v957 = vadd.f32 0.0, %v956
      %v958 = vpop.f32.mrb[0].mxu0
      %v959 = vpop.f32.mrb[0].mxu0
      %v960 = vpop.f32.mrb[0].mxu0
      %961 = vdwg.mxu0
      %v962 = vmul.f32 %v957, 0.25
      %v963 = vsel %vm474, %v962, -inf
      %964 = vmax.xlane.f32.xlu0 %v963
      %v965 = vpop.xlane.xlu0 %964
      %v966 = vsub.f32 %v962, %v965
      %v967 = vmul.f32 %v966, 1.442695
      %v968 = vpow.pop %v967
      %v969 = vsel %vm474, %v968, 0.0
      %970 = vadd.xlane.f32.xlu0 %v969
      %v971 = vpop.xlane.xlu0 %970
      %v972 = vrcp.pop %v971
      %v973 = vmul.f32 %v968, %v972
      %v974 = vpack.c.bf16 %v973, %v973
      %975 = vrot.lane.b32.xlu0 %v422, 80
      %v976 = vpop.permute.xlu0 %975
      %v978 = vsel %vm487, %v974, 0
      %v981 = vand.u32 %v976, %v494
      %983 = vmatprep.subr.bf16.mxu0 0
      %984 = vmatpush1.bf16.msra.mxu0 %v981
      %985 = vmatprep.subr.bf16.mxu0 0
      %986 = vmatpush1.bf16.msra.mxu0 0
      %987 = vmatprep.subr.bf16.mxu0 0
      %988 = vmatpush1.bf16.msra.mxu0 0
      %989 = vmatprep.subr.bf16.mxu0 0
      %990 = vmatpush1.bf16.msra.mxu0 0
      %991 = vmatprep.subr.bf16.mxu0 0
      %992 = vmatpush1.bf16.msra.mxu0 0
      %993 = vmatprep.subr.bf16.mxu0 0
      %994 = vmatpush1.bf16.msra.mxu0 0
      %995 = vmatprep.subr.bf16.mxu0 0
      %996 = vmatpush1.bf16.msra.mxu0 0
      %997 = vmatprep.subr.bf16.mxu0 0
      %998 = vmatpush1.bf16.msra.mxu0 0
      %999 = vmatprep.subr.bf16.mxu0 0
      %1000 = vmatpush1.bf16.msra.mxu0 0
      %1001 = vmatprep.subr.bf16.mxu0 0
      %1002 = vmatpush1.bf16.msra.mxu0 0
      %1003 = vmatprep.subr.bf16.mxu0 0
      %1004 = vmatpush1.bf16.msra.mxu0 0
      %1005 = vmatprep.subr.bf16.mxu0 0
      %1006 = vmatpush1.bf16.msra.mxu0 0
      %1007 = vmatprep.subr.bf16.mxu0 0
      %1008 = vmatpush1.bf16.msra.mxu0 0
      %1009 = vmatprep.subr.bf16.mxu0 0
      %1010 = vmatpush1.bf16.msra.mxu0 0
      %1011 = vmatprep.subr.bf16.mxu0 0
      %1012 = vmatpush1.bf16.msra.mxu0 0
      %1013 = vmatprep.subr.bf16.mxu0 0
      %1014 = vmatpush1.bf16.msra.mxu0 0
      %1015 = vmatprep.mubr.bf16.mxu0 0
      %1016 = vmatmul.mubr.bf16.gmra.mrb[0].mxu0 %v978
      %v1017 = vpop.f32.mrb[0].mxu0
      %v1018 = vadd.f32 0.0, %v1017
      %v1019 = vpop.f32.mrb[0].mxu0
      %v1020 = vpop.f32.mrb[0].mxu0
      %v1021 = vpop.f32.mrb[0].mxu0
      %1022 = vdwg.mxu0
      %v1023 = vpack.c.bf16 %v1018, %v1018
      %v1026 = vunpack.c.l.b16 %v419
      %v1027 = vunpack.c.l.b16 %v420
      %v1028 = vpack.c.b16 %v1027, %v1026
      %v1031 = vsel %vm426, %v1023, 0
      %1033 = vmatprep.subr.bf16.mxu0 0
      %1034 = vmatpush1.bf16.msra.mxu0 %v1028
      %1035 = vmatprep.subr.bf16.mxu0 0
      %1036 = vmatpush1.bf16.msra.mxu0 0
      %1037 = vmatprep.subr.bf16.mxu0 0
      %1038 = vmatpush1.bf16.msra.mxu0 0
      %1039 = vmatprep.subr.bf16.mxu0 0
      %1040 = vmatpush1.bf16.msra.mxu0 0
      %1041 = vmatprep.subr.bf16.mxu0 0
      %1042 = vmatpush1.bf16.msra.mxu0 0
      %1043 = vmatprep.subr.bf16.mxu0 0
      %1044 = vmatpush1.bf16.msra.mxu0 0
      %1045 = vmatprep.subr.bf16.mxu0 0
      %1046 = vmatpush1.bf16.msra.mxu0 0
      %1047 = vmatprep.subr.bf16.mxu0 0
      %1048 = vmatpush1.bf16.msra.mxu0 0
      %1049 = vmatprep.subr.bf16.mxu0 0
      %1050 = vmatpush1.bf16.msra.mxu0 0
      %1051 = vmatprep.subr.bf16.mxu0 0
      %1052 = vmatpush1.bf16.msra.mxu0 0
      %1053 = vmatprep.subr.bf16.mxu0 0
      %1054 = vmatpush1.bf16.msra.mxu0 0
      %1055 = vmatprep.subr.bf16.mxu0 0
      %1056 = vmatpush1.bf16.msra.mxu0 0
      %1057 = vmatprep.subr.bf16.mxu0 0
      %1058 = vmatpush1.bf16.msra.mxu0 0
      %1059 = vmatprep.subr.bf16.mxu0 0
      %1060 = vmatpush1.bf16.msra.mxu0 0
      %1061 = vmatprep.subr.bf16.mxu0 0
      %1062 = vmatpush1.bf16.msra.mxu0 0
      %1063 = vmatprep.subr.bf16.mxu0 0
      %1064 = vmatpush1.bf16.msra.mxu0 0
      %1065 = vmatprep.mubr.bf16.mxu0 0
      %1066 = vmatmul.mubr.bf16.gmra.mrb[0].mxu0 %v1031
      %v1067 = vpop.f32.mrb[0].mxu0
      %v1068 = vadd.f32 0.0, %v1067
      %v1069 = vpop.f32.mrb[0].mxu0
      %v1070 = vpop.f32.mrb[0].mxu0
      %v1071 = vpop.f32.mrb[0].mxu0
      %1072 = vdwg.mxu0
      %v1073 = vadd.f32 %v911, %v1068
      %v1074 = vld [vmem:[%s6] sm:$0x1]
      %v1076 = vlaneseq
      %v1077 = vshrl.u32 %v1076, 7
      %v1078 = vsub.s32 0, %v1077
      %v1079 = vrot.slane %v1074, %v1078
      %v1081 = vadd.f32 %v1073, %v1079
      %v1082 = vadd.f32 %v275, %v1081
      %1083 = vst.msk [vmem:[%s273] sm:$0x1f] %vm278, %v1082
      %p1084 = scmp.lt.s32.totalorder %s18, 1
      %s1085 = scalar_select %p1084, %s18, 1
      %s1086 = smul.addr %s1085, 8
      %s1087 = scalar_lea.vmem %s7, %s1086
      // Predicated region
      $region49: #{_lambda_.6} parent=47 // pred_check
        %p1088 = pneg %p188
      $region50: #{_lambda_.6} parent=47 // pred_check_branch
        %1090 = sbr.rel (%p1088) target = $region52
      $region51: #{_lambda_.6} parent=47 // pred_region
        _
      $region52: #{_lambda_.6} parent=47 // pred_fallthru
        _
    $region48: #{_lambda_.6} parent=5 // pred_fallthru
      _
    %p1091 = scmp.le.s32.totalorder 2, %s13
    // Predicated region
    $region53: #{_lambda_.6} parent=5 // pred_check
      %p1092 = pneg %p1091
    $region54: #{_lambda_.6} parent=5 // pred_check_branch
      %1094 = sbr.rel (%p1092) target = $region56
    $region55: #{_lambda_.6} parent=5 // pred_region
      %s1095 = ssub.s32 %s13, 2
      // Predicated region
      $region57: #{_lambda_.6} parent=55 // pred_check
        %p1096 = pneg %p194
      $region58: #{_lambda_.6} parent=55 // pred_check_branch
        %1098 = sbr.rel (%p1096) target = $region60
      $region59: #{_lambda_.6} parent=55 // pred_region
        %p1099 = scmp.lt.s32.totalorder %s19, 1
        %s1100 = scalar_select %p1099, %s19, 1
        %s1101 = smul.addr %s1100, 8
        %s1102 = scalar_lea.vmem %s7, %s1101
      $region60: #{_lambda_.6} parent=55 // pred_fallthru
        _
    $region56: #{_lambda_.6} parent=5 // pred_fallthru
      _
  $region6: #{_lambda_.6} parent=0 // loop_footer
    %s17 = sadd.s32 1, %s13
  $region7: #{_lambda_.6} parent=0 // loop_footer_branch
    %12 = sbr.rel target = $region3
  $region8: #{_lambda_.6} parent=0 // loop_exit
    _

</llo_original>
